<compile_context>
chip_gen: v7x
topology: tpu7x:2x2x1
jax: 0.10.0
libtpu: 0.0.40
codegen_flags: <defaults>
</compile_context>

<pallas_src>
import jax
import jax.numpy as jnp
from jax import lax
from jax.experimental import pallas as pl
from jax.experimental.pallas import tpu as pltpu


def _scale_pred_kernel(xp_ref, w1_ref, scale_ref, shift_ref, w2_ref, b2_ref,
                       o_ref, col_ref):
    # xp_ref   : (H+2, W+2, Cin) f32   zero-padded NHWC image (resident per n)
    # w1_ref   : (9*Cin, Cmid)   bf16  3x3 conv weights, tap-major (k=dy*3+dx)
    # scale_ref, shift_ref : (1, Cmid) f32  folded BatchNorm scale / shift
    # w2_ref   : (Cmid, Cout_pad) bf16 1x1 conv weights (lane-padded)
    # b2_ref   : (1, Cout_pad)   f32   1x1 conv bias (lane-padded)
    # o_ref    : (TH, W, Cout_pad) f32 output row tile
    # col_ref  : (TH, W, 9*Cin)  f32   im2col scratch
    TH, W, Cout_pad = o_ref.shape
    Cin = xp_ref.shape[2]

    t = pl.program_id(1)
    row0 = pl.multiple_of(t * TH, TH)      # first padded-image row of this tile

    # Build im2col columns: tap k=(dy,dx) lands at static lane offset k*Cin.
    # Unrolled copies (no carried value), dynamic-but-aligned sublane start.
    for k in range(9):
        dy, dx = k // 3, k % 3
        col_ref[:, :, k * Cin:(k + 1) * Cin] = (
            xp_ref[pl.ds(row0 + dy, TH), dx:dx + W, :])

    col = col_ref[...].reshape(TH * W, 9 * Cin).astype(jnp.bfloat16)

    # 3x3 conv == a single MXU matmul over the stacked taps, f32 accumulation.
    acc = jnp.dot(col, w1_ref[...], preferred_element_type=jnp.float32)

    # Folded BatchNorm (eval mode) + LeakyReLU(0.1) epilogue, kept in f32.
    y = acc * scale_ref[...] + shift_ref[...]
    y = jnp.where(y >= 0, y, 0.1 * y)

    # 1x1 conv + bias, lane-dense output (full-width stores).
    out = jnp.dot(y.astype(jnp.bfloat16), w2_ref[...],
                  preferred_element_type=jnp.float32) + b2_ref[...]
    o_ref[...] = out.reshape(TH, W, Cout_pad).astype(o_ref.dtype)


def scale_prediction(x_nchw, params, num_classes):
    """Pallas implementation of ScalePrediction.forward.

    x_nchw: (N, Cin, H, W) float32
    returns: (N, 3, H, W, num_classes + 5) float32 (matches PyTorch permute)
    """
    w1, gamma, beta, run_mean, run_var, w2, b2 = (
        params["w1"], params["gamma"], params["beta"],
        params["run_mean"], params["run_var"], params["w2"], params["b2"],
    )
    eps = 1e-5
    N, Cin, H, W = x_nchw.shape
    Cmid = w1.shape[0]
    Cout = w2.shape[0]
    assert Cout == 3 * (num_classes + 5)

    TH = 8 if H % 8 == 0 else H            # spatial row tile (multiple of 8)
    T = H // TH
    Cout_pad = pl.cdiv(Cout, 128) * 128    # lane-dense output channels

    # NCHW -> NHWC, zero pad spatial dims for the 3x3 "same" conv.
    x_nhwc = jnp.transpose(x_nchw, (0, 2, 3, 1)).astype(jnp.float32)
    xp = jnp.pad(x_nhwc, ((0, 0), (1, 1), (1, 1), (0, 0)))

    # Conv1 weights (Cmid, Cin, 3, 3) -> im2col weight matrix (9*Cin, Cmid),
    # tap-major (k = dy*3 + dx), cast to bf16 for the MXU.
    w1_mat = (jnp.transpose(w1, (2, 3, 1, 0))
              .reshape(9 * Cin, Cmid).astype(jnp.bfloat16))

    # Fold BatchNorm (eval mode) into per-channel scale / shift (f32).
    inv_std = gamma / jnp.sqrt(run_var + eps)
    scale = inv_std.reshape(1, Cmid).astype(jnp.float32)
    shift = (beta - run_mean * inv_std).reshape(1, Cmid).astype(jnp.float32)

    # Conv2 (1x1) weights (Cout, Cmid, 1, 1) -> (Cmid, Cout_pad) bf16; bias f32.
    w2_mat = jnp.transpose(w2[:, :, 0, 0], (1, 0)).astype(jnp.bfloat16)
    w2_mat = jnp.pad(w2_mat, ((0, 0), (0, Cout_pad - Cout)))
    b2_row = jnp.pad(b2.astype(jnp.float32),
                     (0, Cout_pad - Cout)).reshape(1, Cout_pad)

    out_padded = pl.pallas_call(
        _scale_pred_kernel,
        out_shape=jax.ShapeDtypeStruct((N, H, W, Cout_pad), jnp.float32),
        grid_spec=pltpu.PrefetchScalarGridSpec(
            num_scalar_prefetch=0,
            grid=(N, T),
            in_specs=[
                # Whole padded image; index depends only on n -> stays
                # resident across the row-tile axis (free in-kernel halo).
                pl.BlockSpec((pl.Squeezed(), H + 2, W + 2, Cin),
                             lambda n, t: (n, 0, 0, 0)),
                pl.BlockSpec((9 * Cin, Cmid), lambda n, t: (0, 0)),
                pl.BlockSpec((1, Cmid), lambda n, t: (0, 0)),
                pl.BlockSpec((1, Cmid), lambda n, t: (0, 0)),
                pl.BlockSpec((Cmid, Cout_pad), lambda n, t: (0, 0)),
                pl.BlockSpec((1, Cout_pad), lambda n, t: (0, 0)),
            ],
            out_specs=pl.BlockSpec((pl.Squeezed(), TH, W, Cout_pad),
                                   lambda n, t: (n, t, 0, 0)),
            scratch_shapes=[pltpu.VMEM((TH, W, 9 * Cin), jnp.float32)],
        ),
        compiler_params=pltpu.CompilerParams(
            dimension_semantics=("parallel", "parallel"),
            vmem_limit_bytes=48 * 1024 * 1024,
        ),
    )(xp, w1_mat, scale, shift, w2_mat, b2_row)

    # Drop lane padding; NHWC (N,H,W,3*(C+5)) -> (N,3,H,W,C+5), matching
    # PyTorch .reshape(N, 3, C+5, H, W).permute(0, 1, 3, 4, 2).
    out_nhwc = out_padded[..., :Cout]
    return out_nhwc.reshape(N, H, W, 3, num_classes + 5).transpose(0, 3, 1, 2, 4)


def _reference(x_nchw, params, num_classes):
    """Pure-JAX f32 reference (eval-mode BN) used to validate the kernel."""
    w1, gamma, beta, rm, rv, w2, b2 = (
        params["w1"], params["gamma"], params["beta"],
        params["run_mean"], params["run_var"], params["w2"], params["b2"],
    )
    eps = 1e-5
    N, _, H, W = x_nchw.shape
    dn = ("NCHW", "OIHW", "NCHW")
    y = lax.conv_general_dilated(x_nchw, w1, (1, 1), [(1, 1), (1, 1)],
                                 dimension_numbers=dn)
    y = (y - rm[None, :, None, None]) / jnp.sqrt(rv[None, :, None, None] + eps)
    y = y * gamma[None, :, None, None] + beta[None, :, None, None]
    y = jnp.where(y >= 0, y, 0.1 * y)
    y = lax.conv_general_dilated(y, w2, (1, 1), [(0, 0), (0, 0)],
                                 dimension_numbers=dn)
    y = y + b2[None, :, None, None]
    return y.reshape(N, 3, num_classes + 5, H, W).transpose(0, 1, 3, 4, 2)


if __name__ == "__main__":
    # Small shapes consistent with the module.
    N, Cin, H, W = 2, 4, 16, 16
    num_classes = 5
    Cmid = 2 * Cin
    Cout = 3 * (num_classes + 5)

    key = jax.random.PRNGKey(0)
    k = jax.random.split(key, 8)
    x = jax.random.normal(k[0], (N, Cin, H, W), dtype=jnp.float32)
    params = {
        "w1": 0.1 * jax.random.normal(k[1], (Cmid, Cin, 3, 3), dtype=jnp.float32),
        "gamma": 1.0 + 0.1 * jax.random.normal(k[2], (Cmid,), dtype=jnp.float32),
        "beta": 0.1 * jax.random.normal(k[3], (Cmid,), dtype=jnp.float32),
        "run_mean": 0.1 * jax.random.normal(k[4], (Cmid,), dtype=jnp.float32),
        "run_var": 1.0 + 0.1 * jax.random.uniform(k[5], (Cmid,), dtype=jnp.float32),
        "w2": 0.1 * jax.random.normal(k[6], (Cout, Cmid, 1, 1), dtype=jnp.float32),
        "b2": 0.1 * jax.random.normal(k[7], (Cout,), dtype=jnp.float32),
    }

    out = scale_prediction(x, params, num_classes)
    out = jax.block_until_ready(out)
    assert out.shape == (N, 3, H, W, num_classes + 5), out.shape

    ref = jax.block_until_ready(_reference(x, params, num_classes))
    # bf16 MXU operands (f32 accumulate) -> relaxed tolerance vs f32 reference.
    assert jnp.allclose(out, ref, atol=3e-2, rtol=3e-2), \
        float(jnp.max(jnp.abs(out - ref)))

    print("KERNEL_OK")
</pallas_src>

<mosaic_0001>
module attributes {stable_mosaic.version = 11 : i64} {
  func.func @_scale_pred_kernel(%arg0: i32, %arg1: i32, %arg2: memref<1x18x18x4xf32, #tpu.memory_space<vmem>>, %arg3: memref<36x8xbf16, #tpu.memory_space<vmem>>, %arg4: memref<1x8xf32, #tpu.memory_space<vmem>>, %arg5: memref<1x8xf32, #tpu.memory_space<vmem>>, %arg6: memref<8x128xbf16, #tpu.memory_space<vmem>>, %arg7: memref<1x128xf32, #tpu.memory_space<vmem>>, %arg8: memref<1x8x16x128xf32, #tpu.memory_space<vmem>>, %arg9: memref<8x16x36xf32, #tpu.memory_space<vmem>>) attributes {dimension_semantics = [#tpu.dimension_semantics<parallel>, #tpu.dimension_semantics<parallel>], iteration_bounds = array<i64: 2, 2>, scalar_prefetch = 0 : i64, scratch_operands = 1 : i64, tpu.core_type = #tpu.core_type<tc>, window_params = [{transform_indices = @transform_0, window_bounds = array<i64: 1, 18, 18, 4>}, {pipeline_mode = #tpu.pipeline_mode<synchronous>, transform_indices = @transform_1, window_bounds = array<i64: 36, 8>}, {pipeline_mode = #tpu.pipeline_mode<synchronous>, transform_indices = @transform_2, window_bounds = array<i64: 1, 8>}, {pipeline_mode = #tpu.pipeline_mode<synchronous>, transform_indices = @transform_3, window_bounds = array<i64: 1, 8>}, {pipeline_mode = #tpu.pipeline_mode<synchronous>, transform_indices = @transform_4, window_bounds = array<i64: 8, 128>}, {pipeline_mode = #tpu.pipeline_mode<synchronous>, transform_indices = @transform_5, window_bounds = array<i64: 1, 128>}, {transform_indices = @transform_6, window_bounds = array<i64: 1, 8, 16, 128>}]} {
    %c8_i32 = arith.constant 8 : i32
    %0 = arith.muli %arg1, %c8_i32 : i32
    %1 = tpu.assume_multiple %0, 8 : i32
    %c0_i32 = arith.constant 0 : i32
    %2 = arith.addi %1, %c0_i32 : i32
    %c0 = arith.constant 0 : index
    %3 = arith.index_cast %2 : i32 to index
    %c0_0 = arith.constant 0 : index
    %c0_1 = arith.constant 0 : index
    %4 = vector.load %arg2[%c0, %3, %c0_0, %c0_1] : memref<1x18x18x4xf32, #tpu.memory_space<vmem>>, vector<1x8x16x4xf32>
    %5 = vector.shape_cast %4 : vector<1x8x16x4xf32> to vector<8x16x4xf32>
    %c0_2 = arith.constant 0 : index
    %c0_3 = arith.constant 0 : index
    %c0_4 = arith.constant 0 : index
    %6 = vector.load %arg9[%c0_2, %c0_3, %c0_4] : memref<8x16x36xf32, #tpu.memory_space<vmem>>, vector<8x16x4xf32>
    tpu.vector_store %arg9[%c0_2, %c0_3, %c0_4], %5 {strides = array<i32>} : memref<8x16x36xf32, #tpu.memory_space<vmem>>, vector<8x16x4xf32>,
    %c0_i32_5 = arith.constant 0 : i32
    %7 = arith.addi %1, %c0_i32_5 : i32
    %c0_6 = arith.constant 0 : index
    %8 = arith.index_cast %7 : i32 to index
    %c1 = arith.constant 1 : index
    %c0_7 = arith.constant 0 : index
    %9 = vector.load %arg2[%c0_6, %8, %c1, %c0_7] : memref<1x18x18x4xf32, #tpu.memory_space<vmem>>, vector<1x8x16x4xf32>
    %10 = vector.shape_cast %9 : vector<1x8x16x4xf32> to vector<8x16x4xf32>
    %c0_8 = arith.constant 0 : index
    %c0_9 = arith.constant 0 : index
    %c4 = arith.constant 4 : index
    %11 = vector.load %arg9[%c0_8, %c0_9, %c4] : memref<8x16x36xf32, #tpu.memory_space<vmem>>, vector<8x16x4xf32>
    tpu.vector_store %arg9[%c0_8, %c0_9, %c4], %10 {strides = array<i32>} : memref<8x16x36xf32, #tpu.memory_space<vmem>>, vector<8x16x4xf32>,
    %c0_i32_10 = arith.constant 0 : i32
    %12 = arith.addi %1, %c0_i32_10 : i32
    %c0_11 = arith.constant 0 : index
    %13 = arith.index_cast %12 : i32 to index
    %c2 = arith.constant 2 : index
    %c0_12 = arith.constant 0 : index
    %14 = vector.load %arg2[%c0_11, %13, %c2, %c0_12] : memref<1x18x18x4xf32, #tpu.memory_space<vmem>>, vector<1x8x16x4xf32>
    %15 = vector.shape_cast %14 : vector<1x8x16x4xf32> to vector<8x16x4xf32>
    %c0_13 = arith.constant 0 : index
    %c0_14 = arith.constant 0 : index
    %c8 = arith.constant 8 : index
    %16 = vector.load %arg9[%c0_13, %c0_14, %c8] : memref<8x16x36xf32, #tpu.memory_space<vmem>>, vector<8x16x4xf32>
    tpu.vector_store %arg9[%c0_13, %c0_14, %c8], %15 {strides = array<i32>} : memref<8x16x36xf32, #tpu.memory_space<vmem>>, vector<8x16x4xf32>,
    %c1_i32 = arith.constant 1 : i32
    %17 = arith.addi %1, %c1_i32 : i32
    %c0_15 = arith.constant 0 : index
    %18 = arith.index_cast %17 : i32 to index
    %c0_16 = arith.constant 0 : index
    %c0_17 = arith.constant 0 : index
    %19 = vector.load %arg2[%c0_15, %18, %c0_16, %c0_17] : memref<1x18x18x4xf32, #tpu.memory_space<vmem>>, vector<1x8x16x4xf32>
    %20 = vector.shape_cast %19 : vector<1x8x16x4xf32> to vector<8x16x4xf32>
    %c0_18 = arith.constant 0 : index
    %c0_19 = arith.constant 0 : index
    %c12 = arith.constant 12 : index
    %21 = vector.load %arg9[%c0_18, %c0_19, %c12] : memref<8x16x36xf32, #tpu.memory_space<vmem>>, vector<8x16x4xf32>
    tpu.vector_store %arg9[%c0_18, %c0_19, %c12], %20 {strides = array<i32>} : memref<8x16x36xf32, #tpu.memory_space<vmem>>, vector<8x16x4xf32>,
    %c1_i32_20 = arith.constant 1 : i32
    %22 = arith.addi %1, %c1_i32_20 : i32
    %c0_21 = arith.constant 0 : index
    %23 = arith.index_cast %22 : i32 to index
    %c1_22 = arith.constant 1 : index
    %c0_23 = arith.constant 0 : index
    %24 = vector.load %arg2[%c0_21, %23, %c1_22, %c0_23] : memref<1x18x18x4xf32, #tpu.memory_space<vmem>>, vector<1x8x16x4xf32>
    %25 = vector.shape_cast %24 : vector<1x8x16x4xf32> to vector<8x16x4xf32>
    %c0_24 = arith.constant 0 : index
    %c0_25 = arith.constant 0 : index
    %c16 = arith.constant 16 : index
    %26 = vector.load %arg9[%c0_24, %c0_25, %c16] : memref<8x16x36xf32, #tpu.memory_space<vmem>>, vector<8x16x4xf32>
    tpu.vector_store %arg9[%c0_24, %c0_25, %c16], %25 {strides = array<i32>} : memref<8x16x36xf32, #tpu.memory_space<vmem>>, vector<8x16x4xf32>,
    %c1_i32_26 = arith.constant 1 : i32
    %27 = arith.addi %1, %c1_i32_26 : i32
    %c0_27 = arith.constant 0 : index
    %28 = arith.index_cast %27 : i32 to index
    %c2_28 = arith.constant 2 : index
    %c0_29 = arith.constant 0 : index
    %29 = vector.load %arg2[%c0_27, %28, %c2_28, %c0_29] : memref<1x18x18x4xf32, #tpu.memory_space<vmem>>, vector<1x8x16x4xf32>
    %30 = vector.shape_cast %29 : vector<1x8x16x4xf32> to vector<8x16x4xf32>
    %c0_30 = arith.constant 0 : index
    %c0_31 = arith.constant 0 : index
    %c20 = arith.constant 20 : index
    %31 = vector.load %arg9[%c0_30, %c0_31, %c20] : memref<8x16x36xf32, #tpu.memory_space<vmem>>, vector<8x16x4xf32>
    tpu.vector_store %arg9[%c0_30, %c0_31, %c20], %30 {strides = array<i32>} : memref<8x16x36xf32, #tpu.memory_space<vmem>>, vector<8x16x4xf32>,
    %c2_i32 = arith.constant 2 : i32
    %32 = arith.addi %1, %c2_i32 : i32
    %c0_32 = arith.constant 0 : index
    %33 = arith.index_cast %32 : i32 to index
    %c0_33 = arith.constant 0 : index
    %c0_34 = arith.constant 0 : index
    %34 = vector.load %arg2[%c0_32, %33, %c0_33, %c0_34] : memref<1x18x18x4xf32, #tpu.memory_space<vmem>>, vector<1x8x16x4xf32>
    %35 = vector.shape_cast %34 : vector<1x8x16x4xf32> to vector<8x16x4xf32>
    %c0_35 = arith.constant 0 : index
    %c0_36 = arith.constant 0 : index
    %c24 = arith.constant 24 : index
    %36 = vector.load %arg9[%c0_35, %c0_36, %c24] : memref<8x16x36xf32, #tpu.memory_space<vmem>>, vector<8x16x4xf32>
    tpu.vector_store %arg9[%c0_35, %c0_36, %c24], %35 {strides = array<i32>} : memref<8x16x36xf32, #tpu.memory_space<vmem>>, vector<8x16x4xf32>,
    %c2_i32_37 = arith.constant 2 : i32
    %37 = arith.addi %1, %c2_i32_37 : i32
    %c0_38 = arith.constant 0 : index
    %38 = arith.index_cast %37 : i32 to index
    %c1_39 = arith.constant 1 : index
    %c0_40 = arith.constant 0 : index
    %39 = vector.load %arg2[%c0_38, %38, %c1_39, %c0_40] : memref<1x18x18x4xf32, #tpu.memory_space<vmem>>, vector<1x8x16x4xf32>
    %40 = vector.shape_cast %39 : vector<1x8x16x4xf32> to vector<8x16x4xf32>
    %c0_41 = arith.constant 0 : index
    %c0_42 = arith.constant 0 : index
    %c28 = arith.constant 28 : index
    %41 = vector.load %arg9[%c0_41, %c0_42, %c28] : memref<8x16x36xf32, #tpu.memory_space<vmem>>, vector<8x16x4xf32>
    tpu.vector_store %arg9[%c0_41, %c0_42, %c28], %40 {strides = array<i32>} : memref<8x16x36xf32, #tpu.memory_space<vmem>>, vector<8x16x4xf32>,
    %c2_i32_43 = arith.constant 2 : i32
    %42 = arith.addi %1, %c2_i32_43 : i32
    %c0_44 = arith.constant 0 : index
    %43 = arith.index_cast %42 : i32 to index
    %c2_45 = arith.constant 2 : index
    %c0_46 = arith.constant 0 : index
    %44 = vector.load %arg2[%c0_44, %43, %c2_45, %c0_46] : memref<1x18x18x4xf32, #tpu.memory_space<vmem>>, vector<1x8x16x4xf32>
    %45 = vector.shape_cast %44 : vector<1x8x16x4xf32> to vector<8x16x4xf32>
    %c0_47 = arith.constant 0 : index
    %c0_48 = arith.constant 0 : index
    %c32 = arith.constant 32 : index
    %46 = vector.load %arg9[%c0_47, %c0_48, %c32] : memref<8x16x36xf32, #tpu.memory_space<vmem>>, vector<8x16x4xf32>
    tpu.vector_store %arg9[%c0_47, %c0_48, %c32], %45 {strides = array<i32>} : memref<8x16x36xf32, #tpu.memory_space<vmem>>, vector<8x16x4xf32>,
    %c0_49 = arith.constant 0 : index
    %c0_50 = arith.constant 0 : index
    %c0_51 = arith.constant 0 : index
    %47 = vector.load %arg9[%c0_49, %c0_50, %c0_51] : memref<8x16x36xf32, #tpu.memory_space<vmem>>, vector<8x16x36xf32>
    %48 = vector.shape_cast %47 : vector<8x16x36xf32> to vector<128x36xf32>
    %49 = arith.truncf %48 : vector<128x36xf32> to vector<128x36xbf16>
    %c0_52 = arith.constant 0 : index
    %c0_53 = arith.constant 0 : index
    %50 = vector.load %arg3[%c0_52, %c0_53] : memref<36x8xbf16, #tpu.memory_space<vmem>>, vector<36x8xbf16>
    %cst = arith.constant dense<0.000000e+00> : vector<128x8xf32>
    %51 = tpu.matmul %49, %50, %cst {dimension_numbers = #tpu.dot_dimension_numbers<[1], [0], [0], [1], [0, 0, 1, 1], [], []>} : vector<128x36xbf16>, vector<36x8xbf16>, vector<128x8xf32> -> vector<128x8xf32>
    %c0_54 = arith.constant 0 : index
    %c0_55 = arith.constant 0 : index
    %52 = vector.load %arg4[%c0_54, %c0_55] : memref<1x8xf32, #tpu.memory_space<vmem>>, vector<1x8xf32>
    %53 = vector.broadcast %52 : vector<1x8xf32> to vector<128x8xf32>
    %54 = arith.mulf %51, %53 : vector<128x8xf32>
    %c0_56 = arith.constant 0 : index
    %c0_57 = arith.constant 0 : index
    %55 = vector.load %arg5[%c0_56, %c0_57] : memref<1x8xf32, #tpu.memory_space<vmem>>, vector<1x8xf32>
    %56 = vector.broadcast %55 : vector<1x8xf32> to vector<128x8xf32>
    %57 = arith.addf %54, %56 : vector<128x8xf32>
    %cst_58 = arith.constant 0.000000e+00 : f32
    %58 = vector.broadcast %cst_58 : f32 to vector<128x8xf32>
    %59 = arith.cmpf oge, %57, %58 : vector<128x8xf32>
    %cst_59 = arith.constant 1.000000e-01 : f32
    %60 = vector.broadcast %cst_59 : f32 to vector<128x8xf32>
    %61 = arith.mulf %60, %57 : vector<128x8xf32>
    %62 = arith.select %59, %57, %61 : vector<128x8xi1>, vector<128x8xf32>
    %63 = arith.truncf %62 : vector<128x8xf32> to vector<128x8xbf16>
    %c0_60 = arith.constant 0 : index
    %c0_61 = arith.constant 0 : index
    %64 = vector.load %arg6[%c0_60, %c0_61] : memref<8x128xbf16, #tpu.memory_space<vmem>>, vector<8x128xbf16>
    %cst_62 = arith.constant dense<0.000000e+00> : vector<128x128xf32>
    %65 = tpu.matmul %63, %64, %cst_62 {dimension_numbers = #tpu.dot_dimension_numbers<[1], [0], [0], [1], [0, 0, 1, 1], [], []>} : vector<128x8xbf16>, vector<8x128xbf16>, vector<128x128xf32> -> vector<128x128xf32>
    %c0_63 = arith.constant 0 : index
    %c0_64 = arith.constant 0 : index
    %66 = vector.load %arg7[%c0_63, %c0_64] : memref<1x128xf32, #tpu.memory_space<vmem>>, vector<1x128xf32>
    %67 = vector.broadcast %66 : vector<1x128xf32> to vector<128x128xf32>
    %68 = arith.addf %65, %67 : vector<128x128xf32>
    %69 = vector.shape_cast %68 : vector<128x128xf32> to vector<8x16x128xf32>
    %c0_65 = arith.constant 0 : index
    %c0_66 = arith.constant 0 : index
    %c0_67 = arith.constant 0 : index
    %c0_68 = arith.constant 0 : index
    %70 = vector.load %arg8[%c0_65, %c0_66, %c0_67, %c0_68] : memref<1x8x16x128xf32, #tpu.memory_space<vmem>>, vector<1x8x16x128xf32>
    %71 = vector.shape_cast %70 : vector<1x8x16x128xf32> to vector<8x16x128xf32>
    %72 = vector.shape_cast %69 : vector<8x16x128xf32> to vector<1x8x16x128xf32>
    tpu.vector_store %arg8[%c0_65, %c0_66, %c0_67, %c0_68], %72 {strides = array<i32>} : memref<1x8x16x128xf32, #tpu.memory_space<vmem>>, vector<1x8x16x128xf32>,
    return
  }
  func.func @transform_0(%arg0: i32, %arg1: i32) -> (i32, i32, i32, i32) {
    %c0_i32 = arith.constant 0 : i32
    %c0_i32_0 = arith.constant 0 : i32
    %c0_i32_1 = arith.constant 0 : i32
    %c0_i32_2 = arith.constant 0 : i32
    return %arg0, %c0_i32, %c0_i32_0, %c0_i32_1 : i32, i32, i32, i32
  }
  func.func @transform_1(%arg0: i32, %arg1: i32) -> (i32, i32) {
    %c0_i32 = arith.constant 0 : i32
    %c0_i32_0 = arith.constant 0 : i32
    %c0_i32_1 = arith.constant 0 : i32
    return %c0_i32, %c0_i32_0 : i32, i32
  }
  func.func @transform_2(%arg0: i32, %arg1: i32) -> (i32, i32) {
    %c0_i32 = arith.constant 0 : i32
    %c0_i32_0 = arith.constant 0 : i32
    %c0_i32_1 = arith.constant 0 : i32
    return %c0_i32, %c0_i32_0 : i32, i32
  }
  func.func @transform_3(%arg0: i32, %arg1: i32) -> (i32, i32) {
    %c0_i32 = arith.constant 0 : i32
    %c0_i32_0 = arith.constant 0 : i32
    %c0_i32_1 = arith.constant 0 : i32
    return %c0_i32, %c0_i32_0 : i32, i32
  }
  func.func @transform_4(%arg0: i32, %arg1: i32) -> (i32, i32) {
    %c0_i32 = arith.constant 0 : i32
    %c0_i32_0 = arith.constant 0 : i32
    %c0_i32_1 = arith.constant 0 : i32
    return %c0_i32, %c0_i32_0 : i32, i32
  }
  func.func @transform_5(%arg0: i32, %arg1: i32) -> (i32, i32) {
    %c0_i32 = arith.constant 0 : i32
    %c0_i32_0 = arith.constant 0 : i32
    %c0_i32_1 = arith.constant 0 : i32
    return %c0_i32, %c0_i32_0 : i32, i32
  }
  func.func @transform_6(%arg0: i32, %arg1: i32) -> (i32, i32, i32, i32) {
    %c0_i32 = arith.constant 0 : i32
    %c0_i32_0 = arith.constant 0 : i32
    %c0_i32_1 = arith.constant 0 : i32
    return %arg0, %arg1, %c0_i32, %c0_i32_0 : i32, i32, i32, i32
  }
}

</mosaic_0001>

<llo_original>
// kernel: tpu_custom_call.1
$region0: #{tpu_custom_call.1}
  #allocation0 [shape = 'u32[]', space=smem, size = 0x4, offset = 0x4, fixed_abs, tag = 'smem constant byte address 0x4 - core index']
  #allocation1 [shape = 'u32[144,128]{1,0:T(1,128)}', space=vmem, size = 0x12000, scoped, tag = 'internal scratch']
  #allocation2 [shape = 'f32[8,16,36]{2,1,0:T(8,128)}', space=vmem, size = 0x10000, scoped, tag = 'scratch operand']
  %s0 = inlined_call_operand.vmem [shape: f32[2,18,18,4], index: 0, kind: input, shape index: {}]
  %s1 = inlined_call_operand.vmem [shape: bf16[36,8], index: 1, kind: input, shape index: {}]
  %s2 = inlined_call_operand.vmem [shape: f32[1,8], index: 2, kind: input, shape index: {}]
  %s3 = inlined_call_operand.vmem [shape: f32[1,8], index: 3, kind: input, shape index: {}]
  %s4 = inlined_call_operand.vmem [shape: bf16[8,128], index: 4, kind: input, shape index: {}]
  %s5 = inlined_call_operand.vmem [shape: f32[1,128], index: 5, kind: input, shape index: {}]
  %s6 = inlined_call_operand.hbm [shape: f32[2,16,16,128], index: 6, kind: output, shape index: {}]
  %s7 = sld [smem:[#allocation0]]
  $region57: #{tpu_custom_call.1} parent=0
    _
  %s9 = ssub.s32 1, %s7
  %s10 = scalar_select 0, %s9, %s7
  $region1: #{tpu_custom_call.1} parent=0
    #allocation3 [shape = 'u8[131072]{0}', space=vmem, size = 0x20000, scoped, tag = 'output window, operand 0']
    #allocation4 [shape = 's32[2]{0}', space=sflag, size = 0x8, scoped, tag = 'scoped memory for tpu_custom_call.1']
    %11 = vsyncpa [#allocation4], 0
    %s12 = scalar_lea.sflag [#allocation4], 1
    %13 = vsyncpa %s12, 0
    loop: start=0, step=1, limit=6
    $region2: #{tpu_custom_call.1} parent=1 // loop_pre_header
      _
    $region3: #{tpu_custom_call.1} parent=1 // loop_header
      %s15 = sphi 0, %s19
      %p16 = scmp.ge.s32.totalorder %s15, 6
      %s22 = sphi 0, %s34
      %s23 = sphi 0, %s30
      %s24 = sphi 0, %s22
      %s25 = sphi 0, %s23
      %s26 = sphi 0, %s24
      %s27 = sphi 0, %s25
      %s37 = sphi 0, %s39
      %s40 = sphi 0, %s37
      %s41 = sphi 0, %s40
      %s57 = sphi 0, %s41
      %s61 = sphi 0, %s61
      %s63 = sphi 0, %s61
      %s64 = sphi 0, %s63
      %s78 = sphi 0, %s64
      %s82 = sphi 0, %s82
      %s84 = sphi 0, %s82
      %s85 = sphi 0, %s84
      %s99 = sphi 0, %s85
      %s103 = sphi 0, %s103
      %s105 = sphi 0, %s103
      %s106 = sphi 0, %s105
      %s120 = sphi 0, %s106
      %s124 = sphi 0, %s124
      %s126 = sphi 0, %s124
      %s127 = sphi 0, %s126
      %s141 = sphi 0, %s127
      %s145 = sphi 0, %s145
      %s147 = sphi 0, %s145
      %s148 = sphi 0, %s147
      %s162 = sphi 0, %s148
      %s170 = sphi 0, %s172
      %s173 = sphi 0, %s170
      %s174 = sphi 0, %s173
      %s190 = sphi 0, %s174
    $region4: #{tpu_custom_call.1} parent=1 // loop_header_branch
      %18 = sbr.rel (%p16) target = $region8
    $region5: #{tpu_custom_call.1} parent=1 // loop_body
      %s20 = ssub.s32 %s15, 1
      %s21 = ssub.s32 %s15, 2
      %s28 = sadd.s32 1, %s23
      %p29 = scmp.ge.s32.totalorder %s28, 2
      %s30 = scalar_select %p29, 0, %s28
      %s31 = sadd.s32 1, %s22
      %s32 = scalar_select %p29, %s31, %s22
      %p33 = scmp.ge.s32.totalorder %s32, 2
      %s34 = scalar_select %p33, 0, %s32
      %s35 = ssub.s32 %s22, %s34
      %p36 = scmp.eq.s32.totalorder %s35, 0
      %s38 = sadd.s32 %s37, 1
      %s39 = scalar_select %p36, %s37, %s38
      %p42 = pneg %p36
      %p43 = scmp.eq.s32.totalorder %s15, 3
      %p44 = por %p42, %p43
      %p45 = scmp.ne.s32.totalorder %s37, %s40
      %p46 = scmp.eq.s32.totalorder %s15, 0
      %p47 = por %p45, %p46
      %p48 = scmp.ne.s32.totalorder %s37, %s40
      %p49 = scmp.eq.s32.totalorder %s20, 3
      %p50 = por %p48, %p49
      %p51 = scmp.ne.s32.totalorder %s40, %s41
      %p52 = scmp.eq.s32.totalorder %s20, 0
      %p53 = por %p51, %p52
      %p54 = scmp.ne.s32.totalorder %s40, %s41
      %p55 = scmp.eq.s32.totalorder %s21, 3
      %p56 = por %p54, %p55
      %p58 = scmp.ne.s32.totalorder %s41, %s57
      %p59 = scmp.eq.s32.totalorder %s21, 0
      %p60 = por %p58, %p59
      %s62 = sadd.s32 %s61, 1
      %p65 = scmp.eq.s32.totalorder %s15, 3
      %p66 = scmp.ne.s32.totalorder %s61, %s63
      %p67 = scmp.eq.s32.totalorder %s15, 0
      %p68 = por %p66, %p67
      %p69 = scmp.ne.s32.totalorder %s61, %s63
      %p70 = scmp.eq.s32.totalorder %s20, 3
      %p71 = por %p69, %p70
      %p72 = scmp.ne.s32.totalorder %s63, %s64
      %p73 = scmp.eq.s32.totalorder %s20, 0
      %p74 = por %p72, %p73
      %p75 = scmp.ne.s32.totalorder %s63, %s64
      %p76 = scmp.eq.s32.totalorder %s21, 3
      %p77 = por %p75, %p76
      %p79 = scmp.ne.s32.totalorder %s64, %s78
      %p80 = scmp.eq.s32.totalorder %s21, 0
      %p81 = por %p79, %p80
      %s83 = sadd.s32 %s82, 1
      %p86 = scmp.eq.s32.totalorder %s15, 3
      %p87 = scmp.ne.s32.totalorder %s82, %s84
      %p88 = scmp.eq.s32.totalorder %s15, 0
      %p89 = por %p87, %p88
      %p90 = scmp.ne.s32.totalorder %s82, %s84
      %p91 = scmp.eq.s32.totalorder %s20, 3
      %p92 = por %p90, %p91
      %p93 = scmp.ne.s32.totalorder %s84, %s85
      %p94 = scmp.eq.s32.totalorder %s20, 0
      %p95 = por %p93, %p94
      %p96 = scmp.ne.s32.totalorder %s84, %s85
      %p97 = scmp.eq.s32.totalorder %s21, 3
      %p98 = por %p96, %p97
      %p100 = scmp.ne.s32.totalorder %s85, %s99
      %p101 = scmp.eq.s32.totalorder %s21, 0
      %p102 = por %p100, %p101
      %s104 = sadd.s32 %s103, 1
      %p107 = scmp.eq.s32.totalorder %s15, 3
      %p108 = scmp.ne.s32.totalorder %s103, %s105
      %p109 = scmp.eq.s32.totalorder %s15, 0
      %p110 = por %p108, %p109
      %p111 = scmp.ne.s32.totalorder %s103, %s105
      %p112 = scmp.eq.s32.totalorder %s20, 3
      %p113 = por %p111, %p112
      %p114 = scmp.ne.s32.totalorder %s105, %s106
      %p115 = scmp.eq.s32.totalorder %s20, 0
      %p116 = por %p114, %p115
      %p117 = scmp.ne.s32.totalorder %s105, %s106
      %p118 = scmp.eq.s32.totalorder %s21, 3
      %p119 = por %p117, %p118
      %p121 = scmp.ne.s32.totalorder %s106, %s120
      %p122 = scmp.eq.s32.totalorder %s21, 0
      %p123 = por %p121, %p122
      %s125 = sadd.s32 %s124, 1
      %p128 = scmp.eq.s32.totalorder %s15, 3
      %p129 = scmp.ne.s32.totalorder %s124, %s126
      %p130 = scmp.eq.s32.totalorder %s15, 0
      %p131 = por %p129, %p130
      %p132 = scmp.ne.s32.totalorder %s124, %s126
      %p133 = scmp.eq.s32.totalorder %s20, 3
      %p134 = por %p132, %p133
      %p135 = scmp.ne.s32.totalorder %s126, %s127
      %p136 = scmp.eq.s32.totalorder %s20, 0
      %p137 = por %p135, %p136
      %p138 = scmp.ne.s32.totalorder %s126, %s127
      %p139 = scmp.eq.s32.totalorder %s21, 3
      %p140 = por %p138, %p139
      %p142 = scmp.ne.s32.totalorder %s127, %s141
      %p143 = scmp.eq.s32.totalorder %s21, 0
      %p144 = por %p142, %p143
      %s146 = sadd.s32 %s145, 1
      %p149 = scmp.eq.s32.totalorder %s15, 3
      %p150 = scmp.ne.s32.totalorder %s145, %s147
      %p151 = scmp.eq.s32.totalorder %s15, 0
      %p152 = por %p150, %p151
      %p153 = scmp.ne.s32.totalorder %s145, %s147
      %p154 = scmp.eq.s32.totalorder %s20, 3
      %p155 = por %p153, %p154
      %p156 = scmp.ne.s32.totalorder %s147, %s148
      %p157 = scmp.eq.s32.totalorder %s20, 0
      %p158 = por %p156, %p157
      %p159 = scmp.ne.s32.totalorder %s147, %s148
      %p160 = scmp.eq.s32.totalorder %s21, 3
      %p161 = por %p159, %p160
      %p163 = scmp.ne.s32.totalorder %s148, %s162
      %p164 = scmp.eq.s32.totalorder %s21, 0
      %p165 = por %p163, %p164
      %s166 = ssub.s32 %s22, %s34
      %s167 = ssub.s32 %s23, %s30
      %s168 = sor.u32 %s166, %s167
      %p169 = scmp.eq.s32.totalorder %s168, 0
      %s171 = sadd.s32 %s170, 1
      %s172 = scalar_select %p169, %s170, %s171
      %p175 = pneg %p169
      %p176 = scmp.eq.s32.totalorder %s15, 3
      %p177 = por %p175, %p176
      %p178 = scmp.ne.s32.totalorder %s170, %s173
      %p179 = scmp.eq.s32.totalorder %s15, 0
      %p180 = por %p178, %p179
      %p181 = scmp.ne.s32.totalorder %s170, %s173
      %p182 = scmp.eq.s32.totalorder %s20, 3
      %p183 = por %p181, %p182
      %p184 = scmp.ne.s32.totalorder %s173, %s174
      %p185 = scmp.eq.s32.totalorder %s20, 0
      %p186 = por %p184, %p185
      %p187 = scmp.ne.s32.totalorder %s173, %s174
      %p188 = scmp.eq.s32.totalorder %s21, 3
      %p189 = por %p187, %p188
      %p191 = scmp.ne.s32.totalorder %s174, %s190
      %p192 = scmp.eq.s32.totalorder %s21, 0
      %p193 = por %p191, %p192
      %p194 = scmp.le.s32.totalorder 1, %s15
      %p195 = scmp.lt.s32.totalorder %s15, 5
      %p196 = pnand %p194, %p195
      %p197 = pneg %p196
      // Predicated region
      $region9: #{tpu_custom_call.1} parent=5 // pred_check
        _
      $region10: #{tpu_custom_call.1} parent=5 // pred_check_branch
        %199 = sbr.rel (%p196) target = $region12
      $region11: #{tpu_custom_call.1} parent=5 // pred_region
        %s200 = ssub.s32 %s15, 1
        // Predicated region
        $region13: #{tpu_custom_call.1} parent=11 // pred_check
          %p201 = pneg %p74
        $region14: #{tpu_custom_call.1} parent=11 // pred_check_branch
          %203 = sbr.rel (%p201) target = $region16
        $region15: #{tpu_custom_call.1} parent=11 // pred_region
          _
        $region16: #{tpu_custom_call.1} parent=11 // pred_fallthru
          _
        // Predicated region
        $region17: #{tpu_custom_call.1} parent=11 // pred_check
          %p204 = pneg %p95
        $region18: #{tpu_custom_call.1} parent=11 // pred_check_branch
          %206 = sbr.rel (%p204) target = $region20
        $region19: #{tpu_custom_call.1} parent=11 // pred_region
          _
        $region20: #{tpu_custom_call.1} parent=11 // pred_fallthru
          _
        // Predicated region
        $region21: #{tpu_custom_call.1} parent=11 // pred_check
          %p207 = pneg %p116
        $region22: #{tpu_custom_call.1} parent=11 // pred_check_branch
          %209 = sbr.rel (%p207) target = $region24
        $region23: #{tpu_custom_call.1} parent=11 // pred_region
          _
        $region24: #{tpu_custom_call.1} parent=11 // pred_fallthru
          _
        // Predicated region
        $region25: #{tpu_custom_call.1} parent=11 // pred_check
          %p210 = pneg %p137
        $region26: #{tpu_custom_call.1} parent=11 // pred_check_branch
          %212 = sbr.rel (%p210) target = $region28
        $region27: #{tpu_custom_call.1} parent=11 // pred_region
          _
        $region28: #{tpu_custom_call.1} parent=11 // pred_fallthru
          _
        // Predicated region
        $region29: #{tpu_custom_call.1} parent=11 // pred_check
          %p213 = pneg %p158
        $region30: #{tpu_custom_call.1} parent=11 // pred_check_branch
          %215 = sbr.rel (%p213) target = $region32
        $region31: #{tpu_custom_call.1} parent=11 // pred_region
          _
        $region32: #{tpu_custom_call.1} parent=11 // pred_fallthru
          _
      $region12: #{tpu_custom_call.1} parent=5 // pred_fallthru
        _
      %p216 = scmp.lt.s32.totalorder %s15, 4
      // Predicated region
      $region33: #{tpu_custom_call.1} parent=5 // pred_check
        %p217 = pneg %p216
      $region34: #{tpu_custom_call.1} parent=5 // pred_check_branch
        %219 = sbr.rel (%p217) target = $region36
      $region35: #{tpu_custom_call.1} parent=5 // pred_region
        // Predicated region
        $region37: #{tpu_custom_call.1} parent=35 // pred_check
          %p220 = pneg %p47
        $region38: #{tpu_custom_call.1} parent=35 // pred_check_branch
          %222 = sbr.rel (%p220) target = $region40
        $region39: #{tpu_custom_call.1} parent=35 // pred_region
          %p223 = scmp.lt.s32.totalorder %s22, 1
          %s224 = scalar_select %p223, %s22, 1
          %s225 = smul.addr %s224, 54
          %s226 = smul.addr %s225, 8
          %s227 = scalar_lea.vmem %s0, %s226
        $region40: #{tpu_custom_call.1} parent=35 // pred_fallthru
          _
      $region36: #{tpu_custom_call.1} parent=5 // pred_fallthru
        _
      %p228 = scmp.le.s32.totalorder 1, %s15
      %p229 = scmp.lt.s32.totalorder %s15, 5
      %p230 = pnand %p228, %p229
      %p231 = pneg %p230
      // Predicated region
      $region41: #{tpu_custom_call.1} parent=5 // pred_check
        _
      $region42: #{tpu_custom_call.1} parent=5 // pred_check_branch
        %233 = sbr.rel (%p230) target = $region44
      $region43: #{tpu_custom_call.1} parent=5 // pred_region
        %s234 = ssub.s32 %s15, 1
        %p235 = scmp.lt.s32.totalorder %s24, 1
        %s236 = scalar_select %p235, %s24, 1
        %s237 = smul.addr %s236, 54
        %s238 = smul.addr %s237, 8
        %s239 = scalar_lea.vmem %s0, %s238
        %p240 = pneg %p53
        %p241 = pneg %p50
        %p242 = pneg %p74
        %p243 = pneg %p71
        %p244 = pneg %p95
        %p245 = pneg %p92
        %p246 = pneg %p116
        %p247 = pneg %p113
        %p248 = pneg %p137
        %p249 = pneg %p134
        %p250 = pneg %p158
        %p251 = pneg %p155
        %p252 = pneg %p186
        %p253 = pneg %p183
        %s254 = sand.u32 %s173, 1
        %s255 = scalar_lea.sflag [#allocation4], %s254
        %s256 = sand.u32 %s173, 1
        %s257 = smul.addr %s256, 128
        %s258 = scalar_lea.vmem [#allocation3], %s257
        %p259 = scmp.lt.s32.totalorder %s24, 1
        %s260 = scalar_select %p259, %s24, 1
        %s261 = smul.addr %s260, 54
        %s262 = smul.addr %s261, 8
        %s263 = scalar_lea.vmem %s0, %s262
        %s264 = smul.u32 8, %s25
        %s266 = smul.u32 %s25, 8
        %s267 = smul.u32 %s266, 24
        %s268 = scalar_lea.vmem %s263, %s267
        %v269 = vld [vmem:[%s268] sm:$0xff]
        %v270 = vld [vmem:[%s268 + $0x8] sm:$0xff]
        %v271 = vld [vmem:[%s268 + $0x18] sm:$0xff]
        %v272 = vld [vmem:[%s268 + $0x20] sm:$0xff]
        %v273 = vld [vmem:[%s268 + $0x30] sm:$0xff]
        %v274 = vld [vmem:[%s268 + $0x38] sm:$0xff]
        %v275 = vld [vmem:[%s268 + $0x48] sm:$0xff]
        %v276 = vld [vmem:[%s268 + $0x50] sm:$0xff]
        %v277 = vld [vmem:[%s268 + $0x60] sm:$0xff]
        %v278 = vld [vmem:[%s268 + $0x68] sm:$0xff]
        %v279 = vld [vmem:[%s268 + $0x78] sm:$0xff]
        %v280 = vld [vmem:[%s268 + $0x80] sm:$0xff]
        %v281 = vld [vmem:[%s268 + $0x90] sm:$0xff]
        %v282 = vld [vmem:[%s268 + $0x98] sm:$0xff]
        %v283 = vld [vmem:[%s268 + $0xa8] sm:$0xff]
        %v284 = vld [vmem:[%s268 + $0xb0] sm:$0xff]
        %vm285 = vcmask 31744
        %286 = vst.msk [vmem:[#allocation2] sm:$0xff] %vm285, %v269
        %287 = vst.msk [vmem:[#allocation2 + $0x8] sm:$0xff] %vm285, %v270
        %288 = vst.msk [vmem:[#allocation2 + $0x10] sm:$0xff] %vm285, %v271
        %289 = vst.msk [vmem:[#allocation2 + $0x18] sm:$0xff] %vm285, %v272
        %290 = vst.msk [vmem:[#allocation2 + $0x20] sm:$0xff] %vm285, %v273
        %291 = vst.msk [vmem:[#allocation2 + $0x28] sm:$0xff] %vm285, %v274
        %292 = vst.msk [vmem:[#allocation2 + $0x30] sm:$0xff] %vm285, %v275
        %293 = vst.msk [vmem:[#allocation2 + $0x38] sm:$0xff] %vm285, %v276
        %294 = vst.msk [vmem:[#allocation2 + $0x40] sm:$0xff] %vm285, %v277
        %295 = vst.msk [vmem:[#allocation2 + $0x48] sm:$0xff] %vm285, %v278
        %296 = vst.msk [vmem:[#allocation2 + $0x50] sm:$0xff] %vm285, %v279
        %297 = vst.msk [vmem:[#allocation2 + $0x58] sm:$0xff] %vm285, %v280
        %298 = vst.msk [vmem:[#allocation2 + $0x60] sm:$0xff] %vm285, %v281
        %299 = vst.msk [vmem:[#allocation2 + $0x68] sm:$0xff] %vm285, %v282
        %300 = vst.msk [vmem:[#allocation2 + $0x70] sm:$0xff] %vm285, %v283
        %301 = vst.msk [vmem:[#allocation2 + $0x78] sm:$0xff] %vm285, %v284
        %v302 = vld [vmem:[%s268 + $0x1] sm:$0xff]
        %v303 = vld [vmem:[%s268 + $0x9] sm:$0xff]
        %v304 = vld [vmem:[%s268 + $0x19] sm:$0xff]
        %v305 = vld [vmem:[%s268 + $0x21] sm:$0xff]
        %v306 = vld [vmem:[%s268 + $0x31] sm:$0xff]
        %v307 = vld [vmem:[%s268 + $0x39] sm:$0xff]
        %v308 = vld [vmem:[%s268 + $0x49] sm:$0xff]
        %v309 = vld [vmem:[%s268 + $0x51] sm:$0xff]
        %v310 = vld [vmem:[%s268 + $0x61] sm:$0xff]
        %v311 = vld [vmem:[%s268 + $0x69] sm:$0xff]
        %v312 = vld [vmem:[%s268 + $0x79] sm:$0xff]
        %v313 = vld [vmem:[%s268 + $0x81] sm:$0xff]
        %v314 = vld [vmem:[%s268 + $0x91] sm:$0xff]
        %v315 = vld [vmem:[%s268 + $0x99] sm:$0xff]
        %v316 = vld [vmem:[%s268 + $0xa9] sm:$0xff]
        %v317 = vld [vmem:[%s268 + $0xb1] sm:$0xff]
        %334 = vrot.lane.b32.xlu0 %v302, 4
        %v335 = vpop.permute.xlu0 %334
        %336 = vrot.lane.b32.xlu0 %v303, 4
        %v337 = vpop.permute.xlu0 %336
        %338 = vrot.lane.b32.xlu0 %v304, 4
        %v339 = vpop.permute.xlu0 %338
        %340 = vrot.lane.b32.xlu0 %v305, 4
        %v341 = vpop.permute.xlu0 %340
        %342 = vrot.lane.b32.xlu0 %v306, 4
        %v343 = vpop.permute.xlu0 %342
        %344 = vrot.lane.b32.xlu0 %v307, 4
        %v345 = vpop.permute.xlu0 %344
        %346 = vrot.lane.b32.xlu0 %v308, 4
        %v347 = vpop.permute.xlu0 %346
        %348 = vrot.lane.b32.xlu0 %v309, 4
        %v349 = vpop.permute.xlu0 %348
        %350 = vrot.lane.b32.xlu0 %v310, 4
        %v351 = vpop.permute.xlu0 %350
        %352 = vrot.lane.b32.xlu0 %v311, 4
        %v353 = vpop.permute.xlu0 %352
        %354 = vrot.lane.b32.xlu0 %v312, 4
        %v355 = vpop.permute.xlu0 %354
        %356 = vrot.lane.b32.xlu0 %v313, 4
        %v357 = vpop.permute.xlu0 %356
        %358 = vrot.lane.b32.xlu0 %v314, 4
        %v359 = vpop.permute.xlu0 %358
        %360 = vrot.lane.b32.xlu0 %v315, 4
        %v361 = vpop.permute.xlu0 %360
        %362 = vrot.lane.b32.xlu0 %v316, 4
        %v363 = vpop.permute.xlu0 %362
        %364 = vrot.lane.b32.xlu0 %v317, 4
        %v365 = vpop.permute.xlu0 %364
        %vm382 = vcmask 64544
        %383 = vst.msk [vmem:[#allocation2] sm:$0xff] %vm382, %v335
        %384 = vst.msk [vmem:[#allocation2 + $0x8] sm:$0xff] %vm382, %v337
        %385 = vst.msk [vmem:[#allocation2 + $0x10] sm:$0xff] %vm382, %v339
        %386 = vst.msk [vmem:[#allocation2 + $0x18] sm:$0xff] %vm382, %v341
        %387 = vst.msk [vmem:[#allocation2 + $0x20] sm:$0xff] %vm382, %v343
        %388 = vst.msk [vmem:[#allocation2 + $0x28] sm:$0xff] %vm382, %v345
        %389 = vst.msk [vmem:[#allocation2 + $0x30] sm:$0xff] %vm382, %v347
        %390 = vst.msk [vmem:[#allocation2 + $0x38] sm:$0xff] %vm382, %v349
        %391 = vst.msk [vmem:[#allocation2 + $0x40] sm:$0xff] %vm382, %v351
        %392 = vst.msk [vmem:[#allocation2 + $0x48] sm:$0xff] %vm382, %v353
        %393 = vst.msk [vmem:[#allocation2 + $0x50] sm:$0xff] %vm382, %v355
        %394 = vst.msk [vmem:[#allocation2 + $0x58] sm:$0xff] %vm382, %v357
        %395 = vst.msk [vmem:[#allocation2 + $0x60] sm:$0xff] %vm382, %v359
        %396 = vst.msk [vmem:[#allocation2 + $0x68] sm:$0xff] %vm382, %v361
        %397 = vst.msk [vmem:[#allocation2 + $0x70] sm:$0xff] %vm382, %v363
        %398 = vst.msk [vmem:[#allocation2 + $0x78] sm:$0xff] %vm382, %v365
        %v399 = vld [vmem:[%s268 + $0x2] sm:$0xff]
        %v400 = vld [vmem:[%s268 + $0xa] sm:$0xff]
        %v401 = vld [vmem:[%s268 + $0x1a] sm:$0xff]
        %v402 = vld [vmem:[%s268 + $0x22] sm:$0xff]
        %v403 = vld [vmem:[%s268 + $0x32] sm:$0xff]
        %v404 = vld [vmem:[%s268 + $0x3a] sm:$0xff]
        %v405 = vld [vmem:[%s268 + $0x4a] sm:$0xff]
        %v406 = vld [vmem:[%s268 + $0x52] sm:$0xff]
        %v407 = vld [vmem:[%s268 + $0x62] sm:$0xff]
        %v408 = vld [vmem:[%s268 + $0x6a] sm:$0xff]
        %v409 = vld [vmem:[%s268 + $0x7a] sm:$0xff]
        %v410 = vld [vmem:[%s268 + $0x82] sm:$0xff]
        %v411 = vld [vmem:[%s268 + $0x92] sm:$0xff]
        %v412 = vld [vmem:[%s268 + $0x9a] sm:$0xff]
        %v413 = vld [vmem:[%s268 + $0xaa] sm:$0xff]
        %v414 = vld [vmem:[%s268 + $0xb2] sm:$0xff]
        %431 = vrot.lane.b32.xlu0 %v399, 8
        %v432 = vpop.permute.xlu0 %431
        %433 = vrot.lane.b32.xlu0 %v400, 8
        %v434 = vpop.permute.xlu0 %433
        %435 = vrot.lane.b32.xlu0 %v401, 8
        %v436 = vpop.permute.xlu0 %435
        %437 = vrot.lane.b32.xlu0 %v402, 8
        %v438 = vpop.permute.xlu0 %437
        %439 = vrot.lane.b32.xlu0 %v403, 8
        %v440 = vpop.permute.xlu0 %439
        %441 = vrot.lane.b32.xlu0 %v404, 8
        %v442 = vpop.permute.xlu0 %441
        %443 = vrot.lane.b32.xlu0 %v405, 8
        %v444 = vpop.permute.xlu0 %443
        %445 = vrot.lane.b32.xlu0 %v406, 8
        %v446 = vpop.permute.xlu0 %445
        %447 = vrot.lane.b32.xlu0 %v407, 8
        %v448 = vpop.permute.xlu0 %447
        %449 = vrot.lane.b32.xlu0 %v408, 8
        %v450 = vpop.permute.xlu0 %449
        %451 = vrot.lane.b32.xlu0 %v409, 8
        %v452 = vpop.permute.xlu0 %451
        %453 = vrot.lane.b32.xlu0 %v410, 8
        %v454 = vpop.permute.xlu0 %453
        %455 = vrot.lane.b32.xlu0 %v411, 8
        %v456 = vpop.permute.xlu0 %455
        %457 = vrot.lane.b32.xlu0 %v412, 8
        %v458 = vpop.permute.xlu0 %457
        %459 = vrot.lane.b32.xlu0 %v413, 8
        %v460 = vpop.permute.xlu0 %459
        %461 = vrot.lane.b32.xlu0 %v414, 8
        %v462 = vpop.permute.xlu0 %461
        %vm479 = vcmask 97344
        %480 = vst.msk [vmem:[#allocation2] sm:$0xff] %vm479, %v432
        %481 = vst.msk [vmem:[#allocation2 + $0x8] sm:$0xff] %vm479, %v434
        %482 = vst.msk [vmem:[#allocation2 + $0x10] sm:$0xff] %vm479, %v436
        %483 = vst.msk [vmem:[#allocation2 + $0x18] sm:$0xff] %vm479, %v438
        %484 = vst.msk [vmem:[#allocation2 + $0x20] sm:$0xff] %vm479, %v440
        %485 = vst.msk [vmem:[#allocation2 + $0x28] sm:$0xff] %vm479, %v442
        %486 = vst.msk [vmem:[#allocation2 + $0x30] sm:$0xff] %vm479, %v444
        %487 = vst.msk [vmem:[#allocation2 + $0x38] sm:$0xff] %vm479, %v446
        %488 = vst.msk [vmem:[#allocation2 + $0x40] sm:$0xff] %vm479, %v448
        %489 = vst.msk [vmem:[#allocation2 + $0x48] sm:$0xff] %vm479, %v450
        %490 = vst.msk [vmem:[#allocation2 + $0x50] sm:$0xff] %vm479, %v452
        %491 = vst.msk [vmem:[#allocation2 + $0x58] sm:$0xff] %vm479, %v454
        %492 = vst.msk [vmem:[#allocation2 + $0x60] sm:$0xff] %vm479, %v456
        %493 = vst.msk [vmem:[#allocation2 + $0x68] sm:$0xff] %vm479, %v458
        %494 = vst.msk [vmem:[#allocation2 + $0x70] sm:$0xff] %vm479, %v460
        %495 = vst.msk [vmem:[#allocation2 + $0x78] sm:$0xff] %vm479, %v462
        %s496 = sadd.s32 %s266, 1
        %s497 = smul.u32 %s496, 24
        %s498 = scalar_lea.vmem %s263, %s497
        %v499 = vld [vmem:[%s498] sm:$0xff]
        %v500 = vld [vmem:[%s498 + $0x8] sm:$0xff]
        %v501 = vld [vmem:[%s498 + $0x18] sm:$0xff]
        %v502 = vld [vmem:[%s498 + $0x20] sm:$0xff]
        %v503 = vld [vmem:[%s498 + $0x30] sm:$0xff]
        %v504 = vld [vmem:[%s498 + $0x38] sm:$0xff]
        %v505 = vld [vmem:[%s498 + $0x48] sm:$0xff]
        %v506 = vld [vmem:[%s498 + $0x50] sm:$0xff]
        %v507 = vld [vmem:[%s498 + $0x60] sm:$0xff]
        %v508 = vld [vmem:[%s498 + $0x68] sm:$0xff]
        %v509 = vld [vmem:[%s498 + $0x78] sm:$0xff]
        %v510 = vld [vmem:[%s498 + $0x80] sm:$0xff]
        %v511 = vld [vmem:[%s498 + $0x90] sm:$0xff]
        %v512 = vld [vmem:[%s498 + $0x98] sm:$0xff]
        %v513 = vld [vmem:[%s498 + $0xa8] sm:$0xff]
        %v514 = vld [vmem:[%s498 + $0xb0] sm:$0xff]
        %531 = vrot.lane.b32.xlu0 %v499, 12
        %v532 = vpop.permute.xlu0 %531
        %533 = vrot.lane.b32.xlu0 %v500, 12
        %v534 = vpop.permute.xlu0 %533
        %535 = vrot.lane.b32.xlu0 %v501, 12
        %v536 = vpop.permute.xlu0 %535
        %537 = vrot.lane.b32.xlu0 %v502, 12
        %v538 = vpop.permute.xlu0 %537
        %539 = vrot.lane.b32.xlu0 %v503, 12
        %v540 = vpop.permute.xlu0 %539
        %541 = vrot.lane.b32.xlu0 %v504, 12
        %v542 = vpop.permute.xlu0 %541
        %543 = vrot.lane.b32.xlu0 %v505, 12
        %v544 = vpop.permute.xlu0 %543
        %545 = vrot.lane.b32.xlu0 %v506, 12
        %v546 = vpop.permute.xlu0 %545
        %547 = vrot.lane.b32.xlu0 %v507, 12
        %v548 = vpop.permute.xlu0 %547
        %549 = vrot.lane.b32.xlu0 %v508, 12
        %v550 = vpop.permute.xlu0 %549
        %551 = vrot.lane.b32.xlu0 %v509, 12
        %v552 = vpop.permute.xlu0 %551
        %553 = vrot.lane.b32.xlu0 %v510, 12
        %v554 = vpop.permute.xlu0 %553
        %555 = vrot.lane.b32.xlu0 %v511, 12
        %v556 = vpop.permute.xlu0 %555
        %557 = vrot.lane.b32.xlu0 %v512, 12
        %v558 = vpop.permute.xlu0 %557
        %559 = vrot.lane.b32.xlu0 %v513, 12
        %v560 = vpop.permute.xlu0 %559
        %561 = vrot.lane.b32.xlu0 %v514, 12
        %v562 = vpop.permute.xlu0 %561
        %vm579 = vcmask 130144
        %580 = vst.msk [vmem:[#allocation2] sm:$0xff] %vm579, %v532
        %581 = vst.msk [vmem:[#allocation2 + $0x8] sm:$0xff] %vm579, %v534
        %582 = vst.msk [vmem:[#allocation2 + $0x10] sm:$0xff] %vm579, %v536
        %583 = vst.msk [vmem:[#allocation2 + $0x18] sm:$0xff] %vm579, %v538
        %584 = vst.msk [vmem:[#allocation2 + $0x20] sm:$0xff] %vm579, %v540
        %585 = vst.msk [vmem:[#allocation2 + $0x28] sm:$0xff] %vm579, %v542
        %586 = vst.msk [vmem:[#allocation2 + $0x30] sm:$0xff] %vm579, %v544
        %587 = vst.msk [vmem:[#allocation2 + $0x38] sm:$0xff] %vm579, %v546
        %588 = vst.msk [vmem:[#allocation2 + $0x40] sm:$0xff] %vm579, %v548
        %589 = vst.msk [vmem:[#allocation2 + $0x48] sm:$0xff] %vm579, %v550
        %590 = vst.msk [vmem:[#allocation2 + $0x50] sm:$0xff] %vm579, %v552
        %591 = vst.msk [vmem:[#allocation2 + $0x58] sm:$0xff] %vm579, %v554
        %592 = vst.msk [vmem:[#allocation2 + $0x60] sm:$0xff] %vm579, %v556
        %593 = vst.msk [vmem:[#allocation2 + $0x68] sm:$0xff] %vm579, %v558
        %594 = vst.msk [vmem:[#allocation2 + $0x70] sm:$0xff] %vm579, %v560
        %595 = vst.msk [vmem:[#allocation2 + $0x78] sm:$0xff] %vm579, %v562
        %v596 = vld [vmem:[%s498 + $0x1] sm:$0xff]
        %v597 = vld [vmem:[%s498 + $0x9] sm:$0xff]
        %v598 = vld [vmem:[%s498 + $0x19] sm:$0xff]
        %v599 = vld [vmem:[%s498 + $0x21] sm:$0xff]
        %v600 = vld [vmem:[%s498 + $0x31] sm:$0xff]
        %v601 = vld [vmem:[%s498 + $0x39] sm:$0xff]
        %v602 = vld [vmem:[%s498 + $0x49] sm:$0xff]
        %v603 = vld [vmem:[%s498 + $0x51] sm:$0xff]
        %v604 = vld [vmem:[%s498 + $0x61] sm:$0xff]
        %v605 = vld [vmem:[%s498 + $0x69] sm:$0xff]
        %v606 = vld [vmem:[%s498 + $0x79] sm:$0xff]
        %v607 = vld [vmem:[%s498 + $0x81] sm:$0xff]
        %v608 = vld [vmem:[%s498 + $0x91] sm:$0xff]
        %v609 = vld [vmem:[%s498 + $0x99] sm:$0xff]
        %v610 = vld [vmem:[%s498 + $0xa9] sm:$0xff]
        %v611 = vld [vmem:[%s498 + $0xb1] sm:$0xff]
        %628 = vrot.lane.b32.xlu0 %v596, 16
        %v629 = vpop.permute.xlu0 %628
        %630 = vrot.lane.b32.xlu0 %v597, 16
        %v631 = vpop.permute.xlu0 %630
        %632 = vrot.lane.b32.xlu0 %v598, 16
        %v633 = vpop.permute.xlu0 %632
        %634 = vrot.lane.b32.xlu0 %v599, 16
        %v635 = vpop.permute.xlu0 %634
        %636 = vrot.lane.b32.xlu0 %v600, 16
        %v637 = vpop.permute.xlu0 %636
        %638 = vrot.lane.b32.xlu0 %v601, 16
        %v639 = vpop.permute.xlu0 %638
        %640 = vrot.lane.b32.xlu0 %v602, 16
        %v641 = vpop.permute.xlu0 %640
        %642 = vrot.lane.b32.xlu0 %v603, 16
        %v643 = vpop.permute.xlu0 %642
        %644 = vrot.lane.b32.xlu0 %v604, 16
        %v645 = vpop.permute.xlu0 %644
        %646 = vrot.lane.b32.xlu0 %v605, 16
        %v647 = vpop.permute.xlu0 %646
        %648 = vrot.lane.b32.xlu0 %v606, 16
        %v649 = vpop.permute.xlu0 %648
        %650 = vrot.lane.b32.xlu0 %v607, 16
        %v651 = vpop.permute.xlu0 %650
        %652 = vrot.lane.b32.xlu0 %v608, 16
        %v653 = vpop.permute.xlu0 %652
        %654 = vrot.lane.b32.xlu0 %v609, 16
        %v655 = vpop.permute.xlu0 %654
        %656 = vrot.lane.b32.xlu0 %v610, 16
        %v657 = vpop.permute.xlu0 %656
        %658 = vrot.lane.b32.xlu0 %v611, 16
        %v659 = vpop.permute.xlu0 %658
        %vm676 = vcmask 162944
        %677 = vst.msk [vmem:[#allocation2] sm:$0xff] %vm676, %v629
        %678 = vst.msk [vmem:[#allocation2 + $0x8] sm:$0xff] %vm676, %v631
        %679 = vst.msk [vmem:[#allocation2 + $0x10] sm:$0xff] %vm676, %v633
        %680 = vst.msk [vmem:[#allocation2 + $0x18] sm:$0xff] %vm676, %v635
        %681 = vst.msk [vmem:[#allocation2 + $0x20] sm:$0xff] %vm676, %v637
        %682 = vst.msk [vmem:[#allocation2 + $0x28] sm:$0xff] %vm676, %v639
        %683 = vst.msk [vmem:[#allocation2 + $0x30] sm:$0xff] %vm676, %v641
        %684 = vst.msk [vmem:[#allocation2 + $0x38] sm:$0xff] %vm676, %v643
        %685 = vst.msk [vmem:[#allocation2 + $0x40] sm:$0xff] %vm676, %v645
        %686 = vst.msk [vmem:[#allocation2 + $0x48] sm:$0xff] %vm676, %v647
        %687 = vst.msk [vmem:[#allocation2 + $0x50] sm:$0xff] %vm676, %v649
        %688 = vst.msk [vmem:[#allocation2 + $0x58] sm:$0xff] %vm676, %v651
        %689 = vst.msk [vmem:[#allocation2 + $0x60] sm:$0xff] %vm676, %v653
        %690 = vst.msk [vmem:[#allocation2 + $0x68] sm:$0xff] %vm676, %v655
        %691 = vst.msk [vmem:[#allocation2 + $0x70] sm:$0xff] %vm676, %v657
        %692 = vst.msk [vmem:[#allocation2 + $0x78] sm:$0xff] %vm676, %v659
        %v693 = vld [vmem:[%s498 + $0x2] sm:$0xff]
        %v694 = vld [vmem:[%s498 + $0xa] sm:$0xff]
        %v695 = vld [vmem:[%s498 + $0x1a] sm:$0xff]
        %v696 = vld [vmem:[%s498 + $0x22] sm:$0xff]
        %v697 = vld [vmem:[%s498 + $0x32] sm:$0xff]
        %v698 = vld [vmem:[%s498 + $0x3a] sm:$0xff]
        %v699 = vld [vmem:[%s498 + $0x4a] sm:$0xff]
        %v700 = vld [vmem:[%s498 + $0x52] sm:$0xff]
        %v701 = vld [vmem:[%s498 + $0x62] sm:$0xff]
        %v702 = vld [vmem:[%s498 + $0x6a] sm:$0xff]
        %v703 = vld [vmem:[%s498 + $0x7a] sm:$0xff]
        %v704 = vld [vmem:[%s498 + $0x82] sm:$0xff]
        %v705 = vld [vmem:[%s498 + $0x92] sm:$0xff]
        %v706 = vld [vmem:[%s498 + $0x9a] sm:$0xff]
        %v707 = vld [vmem:[%s498 + $0xaa] sm:$0xff]
        %v708 = vld [vmem:[%s498 + $0xb2] sm:$0xff]
        %725 = vrot.lane.b32.xlu0 %v693, 20
        %v726 = vpop.permute.xlu0 %725
        %727 = vrot.lane.b32.xlu0 %v694, 20
        %v728 = vpop.permute.xlu0 %727
        %729 = vrot.lane.b32.xlu0 %v695, 20
        %v730 = vpop.permute.xlu0 %729
        %731 = vrot.lane.b32.xlu0 %v696, 20
        %v732 = vpop.permute.xlu0 %731
        %733 = vrot.lane.b32.xlu0 %v697, 20
        %v734 = vpop.permute.xlu0 %733
        %735 = vrot.lane.b32.xlu0 %v698, 20
        %v736 = vpop.permute.xlu0 %735
        %737 = vrot.lane.b32.xlu0 %v699, 20
        %v738 = vpop.permute.xlu0 %737
        %739 = vrot.lane.b32.xlu0 %v700, 20
        %v740 = vpop.permute.xlu0 %739
        %741 = vrot.lane.b32.xlu0 %v701, 20
        %v742 = vpop.permute.xlu0 %741
        %743 = vrot.lane.b32.xlu0 %v702, 20
        %v744 = vpop.permute.xlu0 %743
        %745 = vrot.lane.b32.xlu0 %v703, 20
        %v746 = vpop.permute.xlu0 %745
        %747 = vrot.lane.b32.xlu0 %v704, 20
        %v748 = vpop.permute.xlu0 %747
        %749 = vrot.lane.b32.xlu0 %v705, 20
        %v750 = vpop.permute.xlu0 %749
        %751 = vrot.lane.b32.xlu0 %v706, 20
        %v752 = vpop.permute.xlu0 %751
        %753 = vrot.lane.b32.xlu0 %v707, 20
        %v754 = vpop.permute.xlu0 %753
        %755 = vrot.lane.b32.xlu0 %v708, 20
        %v756 = vpop.permute.xlu0 %755
        %vm773 = vcmask 195744
        %774 = vst.msk [vmem:[#allocation2] sm:$0xff] %vm773, %v726
        %775 = vst.msk [vmem:[#allocation2 + $0x8] sm:$0xff] %vm773, %v728
        %776 = vst.msk [vmem:[#allocation2 + $0x10] sm:$0xff] %vm773, %v730
        %777 = vst.msk [vmem:[#allocation2 + $0x18] sm:$0xff] %vm773, %v732
        %778 = vst.msk [vmem:[#allocation2 + $0x20] sm:$0xff] %vm773, %v734
        %779 = vst.msk [vmem:[#allocation2 + $0x28] sm:$0xff] %vm773, %v736
        %780 = vst.msk [vmem:[#allocation2 + $0x30] sm:$0xff] %vm773, %v738
        %781 = vst.msk [vmem:[#allocation2 + $0x38] sm:$0xff] %vm773, %v740
        %782 = vst.msk [vmem:[#allocation2 + $0x40] sm:$0xff] %vm773, %v742
        %783 = vst.msk [vmem:[#allocation2 + $0x48] sm:$0xff] %vm773, %v744
        %784 = vst.msk [vmem:[#allocation2 + $0x50] sm:$0xff] %vm773, %v746
        %785 = vst.msk [vmem:[#allocation2 + $0x58] sm:$0xff] %vm773, %v748
        %786 = vst.msk [vmem:[#allocation2 + $0x60] sm:$0xff] %vm773, %v750
        %787 = vst.msk [vmem:[#allocation2 + $0x68] sm:$0xff] %vm773, %v752
        %788 = vst.msk [vmem:[#allocation2 + $0x70] sm:$0xff] %vm773, %v754
        %789 = vst.msk [vmem:[#allocation2 + $0x78] sm:$0xff] %vm773, %v756
        %s790 = sadd.s32 %s266, 2
        %s791 = smul.u32 %s790, 24
        %s792 = scalar_lea.vmem %s263, %s791
        %v793 = vld [vmem:[%s792] sm:$0xff]
        %v794 = vld [vmem:[%s792 + $0x8] sm:$0xff]
        %v795 = vld [vmem:[%s792 + $0x18] sm:$0xff]
        %v796 = vld [vmem:[%s792 + $0x20] sm:$0xff]
        %v797 = vld [vmem:[%s792 + $0x30] sm:$0xff]
        %v798 = vld [vmem:[%s792 + $0x38] sm:$0xff]
        %v799 = vld [vmem:[%s792 + $0x48] sm:$0xff]
        %v800 = vld [vmem:[%s792 + $0x50] sm:$0xff]
        %v801 = vld [vmem:[%s792 + $0x60] sm:$0xff]
        %v802 = vld [vmem:[%s792 + $0x68] sm:$0xff]
        %v803 = vld [vmem:[%s792 + $0x78] sm:$0xff]
        %v804 = vld [vmem:[%s792 + $0x80] sm:$0xff]
        %v805 = vld [vmem:[%s792 + $0x90] sm:$0xff]
        %v806 = vld [vmem:[%s792 + $0x98] sm:$0xff]
        %v807 = vld [vmem:[%s792 + $0xa8] sm:$0xff]
        %v808 = vld [vmem:[%s792 + $0xb0] sm:$0xff]
        %825 = vrot.lane.b32.xlu0 %v793, 24
        %v826 = vpop.permute.xlu0 %825
        %827 = vrot.lane.b32.xlu0 %v794, 24
        %v828 = vpop.permute.xlu0 %827
        %829 = vrot.lane.b32.xlu0 %v795, 24
        %v830 = vpop.permute.xlu0 %829
        %831 = vrot.lane.b32.xlu0 %v796, 24
        %v832 = vpop.permute.xlu0 %831
        %833 = vrot.lane.b32.xlu0 %v797, 24
        %v834 = vpop.permute.xlu0 %833
        %835 = vrot.lane.b32.xlu0 %v798, 24
        %v836 = vpop.permute.xlu0 %835
        %837 = vrot.lane.b32.xlu0 %v799, 24
        %v838 = vpop.permute.xlu0 %837
        %839 = vrot.lane.b32.xlu0 %v800, 24
        %v840 = vpop.permute.xlu0 %839
        %841 = vrot.lane.b32.xlu0 %v801, 24
        %v842 = vpop.permute.xlu0 %841
        %843 = vrot.lane.b32.xlu0 %v802, 24
        %v844 = vpop.permute.xlu0 %843
        %845 = vrot.lane.b32.xlu0 %v803, 24
        %v846 = vpop.permute.xlu0 %845
        %847 = vrot.lane.b32.xlu0 %v804, 24
        %v848 = vpop.permute.xlu0 %847
        %849 = vrot.lane.b32.xlu0 %v805, 24
        %v850 = vpop.permute.xlu0 %849
        %851 = vrot.lane.b32.xlu0 %v806, 24
        %v852 = vpop.permute.xlu0 %851
        %853 = vrot.lane.b32.xlu0 %v807, 24
        %v854 = vpop.permute.xlu0 %853
        %855 = vrot.lane.b32.xlu0 %v808, 24
        %v856 = vpop.permute.xlu0 %855
        %vm873 = vcmask 228544
        %874 = vst.msk [vmem:[#allocation2] sm:$0xff] %vm873, %v826
        %875 = vst.msk [vmem:[#allocation2 + $0x8] sm:$0xff] %vm873, %v828
        %876 = vst.msk [vmem:[#allocation2 + $0x10] sm:$0xff] %vm873, %v830
        %877 = vst.msk [vmem:[#allocation2 + $0x18] sm:$0xff] %vm873, %v832
        %878 = vst.msk [vmem:[#allocation2 + $0x20] sm:$0xff] %vm873, %v834
        %879 = vst.msk [vmem:[#allocation2 + $0x28] sm:$0xff] %vm873, %v836
        %880 = vst.msk [vmem:[#allocation2 + $0x30] sm:$0xff] %vm873, %v838
        %881 = vst.msk [vmem:[#allocation2 + $0x38] sm:$0xff] %vm873, %v840
        %882 = vst.msk [vmem:[#allocation2 + $0x40] sm:$0xff] %vm873, %v842
        %883 = vst.msk [vmem:[#allocation2 + $0x48] sm:$0xff] %vm873, %v844
        %884 = vst.msk [vmem:[#allocation2 + $0x50] sm:$0xff] %vm873, %v846
        %885 = vst.msk [vmem:[#allocation2 + $0x58] sm:$0xff] %vm873, %v848
        %886 = vst.msk [vmem:[#allocation2 + $0x60] sm:$0xff] %vm873, %v850
        %887 = vst.msk [vmem:[#allocation2 + $0x68] sm:$0xff] %vm873, %v852
        %888 = vst.msk [vmem:[#allocation2 + $0x70] sm:$0xff] %vm873, %v854
        %889 = vst.msk [vmem:[#allocation2 + $0x78] sm:$0xff] %vm873, %v856
        %v890 = vld [vmem:[%s792 + $0x1] sm:$0xff]
        %v891 = vld [vmem:[%s792 + $0x9] sm:$0xff]
        %v892 = vld [vmem:[%s792 + $0x19] sm:$0xff]
        %v893 = vld [vmem:[%s792 + $0x21] sm:$0xff]
        %v894 = vld [vmem:[%s792 + $0x31] sm:$0xff]
        %v895 = vld [vmem:[%s792 + $0x39] sm:$0xff]
        %v896 = vld [vmem:[%s792 + $0x49] sm:$0xff]
        %v897 = vld [vmem:[%s792 + $0x51] sm:$0xff]
        %v898 = vld [vmem:[%s792 + $0x61] sm:$0xff]
        %v899 = vld [vmem:[%s792 + $0x69] sm:$0xff]
        %v900 = vld [vmem:[%s792 + $0x79] sm:$0xff]
        %v901 = vld [vmem:[%s792 + $0x81] sm:$0xff]
        %v902 = vld [vmem:[%s792 + $0x91] sm:$0xff]
        %v903 = vld [vmem:[%s792 + $0x99] sm:$0xff]
        %v904 = vld [vmem:[%s792 + $0xa9] sm:$0xff]
        %v905 = vld [vmem:[%s792 + $0xb1] sm:$0xff]
        %922 = vrot.lane.b32.xlu0 %v890, 28
        %v923 = vpop.permute.xlu0 %922
        %924 = vrot.lane.b32.xlu0 %v891, 28
        %v925 = vpop.permute.xlu0 %924
        %926 = vrot.lane.b32.xlu0 %v892, 28
        %v927 = vpop.permute.xlu0 %926
        %928 = vrot.lane.b32.xlu0 %v893, 28
        %v929 = vpop.permute.xlu0 %928
        %930 = vrot.lane.b32.xlu0 %v894, 28
        %v931 = vpop.permute.xlu0 %930
        %932 = vrot.lane.b32.xlu0 %v895, 28
        %v933 = vpop.permute.xlu0 %932
        %934 = vrot.lane.b32.xlu0 %v896, 28
        %v935 = vpop.permute.xlu0 %934
        %936 = vrot.lane.b32.xlu0 %v897, 28
        %v937 = vpop.permute.xlu0 %936
        %938 = vrot.lane.b32.xlu0 %v898, 28
        %v939 = vpop.permute.xlu0 %938
        %940 = vrot.lane.b32.xlu0 %v899, 28
        %v941 = vpop.permute.xlu0 %940
        %942 = vrot.lane.b32.xlu0 %v900, 28
        %v943 = vpop.permute.xlu0 %942
        %944 = vrot.lane.b32.xlu0 %v901, 28
        %v945 = vpop.permute.xlu0 %944
        %946 = vrot.lane.b32.xlu0 %v902, 28
        %v947 = vpop.permute.xlu0 %946
        %948 = vrot.lane.b32.xlu0 %v903, 28
        %v949 = vpop.permute.xlu0 %948
        %950 = vrot.lane.b32.xlu0 %v904, 28
        %v951 = vpop.permute.xlu0 %950
        %952 = vrot.lane.b32.xlu0 %v905, 28
        %v953 = vpop.permute.xlu0 %952
        %vm970 = vcmask 261344
        %971 = vst.msk [vmem:[#allocation2] sm:$0xff] %vm970, %v923
        %972 = vst.msk [vmem:[#allocation2 + $0x8] sm:$0xff] %vm970, %v925
        %973 = vst.msk [vmem:[#allocation2 + $0x10] sm:$0xff] %vm970, %v927
        %974 = vst.msk [vmem:[#allocation2 + $0x18] sm:$0xff] %vm970, %v929
        %975 = vst.msk [vmem:[#allocation2 + $0x20] sm:$0xff] %vm970, %v931
        %976 = vst.msk [vmem:[#allocation2 + $0x28] sm:$0xff] %vm970, %v933
        %977 = vst.msk [vmem:[#allocation2 + $0x30] sm:$0xff] %vm970, %v935
        %978 = vst.msk [vmem:[#allocation2 + $0x38] sm:$0xff] %vm970, %v937
        %979 = vst.msk [vmem:[#allocation2 + $0x40] sm:$0xff] %vm970, %v939
        %980 = vst.msk [vmem:[#allocation2 + $0x48] sm:$0xff] %vm970, %v941
        %981 = vst.msk [vmem:[#allocation2 + $0x50] sm:$0xff] %vm970, %v943
        %982 = vst.msk [vmem:[#allocation2 + $0x58] sm:$0xff] %vm970, %v945
        %983 = vst.msk [vmem:[#allocation2 + $0x60] sm:$0xff] %vm970, %v947
        %984 = vst.msk [vmem:[#allocation2 + $0x68] sm:$0xff] %vm970, %v949
        %985 = vst.msk [vmem:[#allocation2 + $0x70] sm:$0xff] %vm970, %v951
        %986 = vst.msk [vmem:[#allocation2 + $0x78] sm:$0xff] %vm970, %v953
        %v987 = vld [vmem:[%s792 + $0x2] sm:$0xff]
        %v988 = vld [vmem:[%s792 + $0xa] sm:$0xff]
        %v989 = vld [vmem:[%s792 + $0x1a] sm:$0xff]
        %v990 = vld [vmem:[%s792 + $0x22] sm:$0xff]
        %v991 = vld [vmem:[%s792 + $0x32] sm:$0xff]
        %v992 = vld [vmem:[%s792 + $0x3a] sm:$0xff]
        %v993 = vld [vmem:[%s792 + $0x4a] sm:$0xff]
        %v994 = vld [vmem:[%s792 + $0x52] sm:$0xff]
        %v995 = vld [vmem:[%s792 + $0x62] sm:$0xff]
        %v996 = vld [vmem:[%s792 + $0x6a] sm:$0xff]
        %v997 = vld [vmem:[%s792 + $0x7a] sm:$0xff]
        %v998 = vld [vmem:[%s792 + $0x82] sm:$0xff]
        %v999 = vld [vmem:[%s792 + $0x92] sm:$0xff]
        %v1000 = vld [vmem:[%s792 + $0x9a] sm:$0xff]
        %v1001 = vld [vmem:[%s792 + $0xaa] sm:$0xff]
        %v1002 = vld [vmem:[%s792 + $0xb2] sm:$0xff]
        %1019 = vrot.lane.b32.xlu0 %v987, 32
        %v1020 = vpop.permute.xlu0 %1019
        %1021 = vrot.lane.b32.xlu0 %v988, 32
        %v1022 = vpop.permute.xlu0 %1021
        %1023 = vrot.lane.b32.xlu0 %v989, 32
        %v1024 = vpop.permute.xlu0 %1023
        %1025 = vrot.lane.b32.xlu0 %v990, 32
        %v1026 = vpop.permute.xlu0 %1025
        %1027 = vrot.lane.b32.xlu0 %v991, 32
        %v1028 = vpop.permute.xlu0 %1027
        %1029 = vrot.lane.b32.xlu0 %v992, 32
        %v1030 = vpop.permute.xlu0 %1029
        %1031 = vrot.lane.b32.xlu0 %v993, 32
        %v1032 = vpop.permute.xlu0 %1031
        %1033 = vrot.lane.b32.xlu0 %v994, 32
        %v1034 = vpop.permute.xlu0 %1033
        %1035 = vrot.lane.b32.xlu0 %v995, 32
        %v1036 = vpop.permute.xlu0 %1035
        %1037 = vrot.lane.b32.xlu0 %v996, 32
        %v1038 = vpop.permute.xlu0 %1037
        %1039 = vrot.lane.b32.xlu0 %v997, 32
        %v1040 = vpop.permute.xlu0 %1039
        %1041 = vrot.lane.b32.xlu0 %v998, 32
        %v1042 = vpop.permute.xlu0 %1041
        %1043 = vrot.lane.b32.xlu0 %v999, 32
        %v1044 = vpop.permute.xlu0 %1043
        %1045 = vrot.lane.b32.xlu0 %v1000, 32
        %v1046 = vpop.permute.xlu0 %1045
        %1047 = vrot.lane.b32.xlu0 %v1001, 32
        %v1048 = vpop.permute.xlu0 %1047
        %1049 = vrot.lane.b32.xlu0 %v1002, 32
        %v1050 = vpop.permute.xlu0 %1049
        %vm1067 = vcmask 294144
        %1068 = vst.msk [vmem:[#allocation2] sm:$0xff] %vm1067, %v1020
        %1069 = vst.msk [vmem:[#allocation2 + $0x8] sm:$0xff] %vm1067, %v1022
        %1070 = vst.msk [vmem:[#allocation2 + $0x10] sm:$0xff] %vm1067, %v1024
        %1071 = vst.msk [vmem:[#allocation2 + $0x18] sm:$0xff] %vm1067, %v1026
        %1072 = vst.msk [vmem:[#allocation2 + $0x20] sm:$0xff] %vm1067, %v1028
        %1073 = vst.msk [vmem:[#allocation2 + $0x28] sm:$0xff] %vm1067, %v1030
        %1074 = vst.msk [vmem:[#allocation2 + $0x30] sm:$0xff] %vm1067, %v1032
        %1075 = vst.msk [vmem:[#allocation2 + $0x38] sm:$0xff] %vm1067, %v1034
        %1076 = vst.msk [vmem:[#allocation2 + $0x40] sm:$0xff] %vm1067, %v1036
        %1077 = vst.msk [vmem:[#allocation2 + $0x48] sm:$0xff] %vm1067, %v1038
        %1078 = vst.msk [vmem:[#allocation2 + $0x50] sm:$0xff] %vm1067, %v1040
        %1079 = vst.msk [vmem:[#allocation2 + $0x58] sm:$0xff] %vm1067, %v1042
        %1080 = vst.msk [vmem:[#allocation2 + $0x60] sm:$0xff] %vm1067, %v1044
        %1081 = vst.msk [vmem:[#allocation2 + $0x68] sm:$0xff] %vm1067, %v1046
        %1082 = vst.msk [vmem:[#allocation2 + $0x70] sm:$0xff] %vm1067, %v1048
        %1083 = vst.msk [vmem:[#allocation2 + $0x78] sm:$0xff] %vm1067, %v1050
        %v1084 = vld [vmem:[#allocation2] sm:$0xff]
        %v1085 = vld [vmem:[#allocation2 + $0x8] sm:$0xff]
        %v1086 = vld [vmem:[#allocation2 + $0x10] sm:$0xff]
        %v1087 = vld [vmem:[#allocation2 + $0x18] sm:$0xff]
        %v1088 = vld [vmem:[#allocation2 + $0x20] sm:$0xff]
        %v1089 = vld [vmem:[#allocation2 + $0x28] sm:$0xff]
        %v1090 = vld [vmem:[#allocation2 + $0x30] sm:$0xff]
        %v1091 = vld [vmem:[#allocation2 + $0x38] sm:$0xff]
        %v1092 = vld [vmem:[#allocation2 + $0x40] sm:$0xff]
        %v1093 = vld [vmem:[#allocation2 + $0x48] sm:$0xff]
        %v1094 = vld [vmem:[#allocation2 + $0x50] sm:$0xff]
        %v1095 = vld [vmem:[#allocation2 + $0x58] sm:$0xff]
        %v1096 = vld [vmem:[#allocation2 + $0x60] sm:$0xff]
        %v1097 = vld [vmem:[#allocation2 + $0x68] sm:$0xff]
        %v1098 = vld [vmem:[#allocation2 + $0x70] sm:$0xff]
        %v1099 = vld [vmem:[#allocation2 + $0x78] sm:$0xff]
        %v1100 = vpack.c.bf16 %v1085, %v1084
        %v1101 = vpack.c.bf16 %v1087, %v1086
        %v1102 = vpack.c.bf16 %v1089, %v1088
        %v1103 = vpack.c.bf16 %v1091, %v1090
        %v1104 = vpack.c.bf16 %v1093, %v1092
        %v1105 = vpack.c.bf16 %v1095, %v1094
        %v1106 = vpack.c.bf16 %v1097, %v1096
        %v1107 = vpack.c.bf16 %v1099, %v1098
        %v1108 = vld [vmem:[%s1] sm:$0xf]
        %v1109 = vld [vmem:[%s1 + $0x4] sm:$0xf]
        %v1110 = vld [vmem:[%s1 + $0x8] sm:$0xf]
        %v1111 = vld [vmem:[%s1 + $0xc] sm:$0xf]
        %v1112 = vld [vmem:[%s1 + $0x10] sm:$0x3]
        %v1118 = vunpack.c.l.b16 %v1108
        %v1119 = vunpack.c.l.b16 %v1109
        %v1120 = vunpack.c.l.b16 %v1110
        %v1121 = vunpack.c.l.b16 %v1111
        %v1122 = vunpack.c.l.b16 %v1112
        %v1123 = vpack.c.b16 %v1119, %v1118
        %v1124 = vpack.c.b16 %v1121, %v1120
        %v1125 = vpack.c.b16 %v1122, %v1122
        %vm1128 = vcmask 293888
        %v1130 = vsel %vm1128, %v1100, 0
        %v1133 = vsel %vm1128, %v1101, 0
        %v1136 = vsel %vm1128, %v1102, 0
        %v1139 = vsel %vm1128, %v1103, 0
        %v1142 = vsel %vm1128, %v1104, 0
        %v1145 = vsel %vm1128, %v1105, 0
        %v1148 = vsel %vm1128, %v1106, 0
        %v1151 = vsel %vm1128, %v1107, 0
        %vm1153 = vcmask 1041408
        %v1155 = vsel %vm1153, %v1125, 0
        %1157 = vmatprep.subr.bf16.mxu0 0
        %1158 = vmatpush1.bf16.msra.mxu0 %v1123
        %1159 = vmatprep.subr.bf16.mxu0 0
        %1160 = vmatpush1.bf16.msra.mxu0 %v1124
        %1161 = vmatprep.subr.bf16.mxu0 0
        %1162 = vmatpush1.bf16.msra.mxu0 %v1155
        %1163 = vmatprep.subr.bf16.mxu0 0
        %1164 = vmatpush1.bf16.msra.mxu0 0
        %1165 = vmatprep.subr.bf16.mxu0 0
        %1166 = vmatpush1.bf16.msra.mxu0 0
        %1167 = vmatprep.subr.bf16.mxu0 0
        %1168 = vmatpush1.bf16.msra.mxu0 0
        %1169 = vmatprep.subr.bf16.mxu0 0
        %1170 = vmatpush1.bf16.msra.mxu0 0
        %1171 = vmatprep.subr.bf16.mxu0 0
        %1172 = vmatpush1.bf16.msra.mxu0 0
        %1173 = vmatprep.subr.bf16.mxu0 0
        %1174 = vmatpush1.bf16.msra.mxu0 0
        %1175 = vmatprep.subr.bf16.mxu0 0
        %1176 = vmatpush1.bf16.msra.mxu0 0
        %1177 = vmatprep.subr.bf16.mxu0 0
        %1178 = vmatpush1.bf16.msra.mxu0 0
        %1179 = vmatprep.subr.bf16.mxu0 0
        %1180 = vmatpush1.bf16.msra.mxu0 0
        %1181 = vmatprep.subr.bf16.mxu0 0
        %1182 = vmatpush1.bf16.msra.mxu0 0
        %1183 = vmatprep.subr.bf16.mxu0 0
        %1184 = vmatpush1.bf16.msra.mxu0 0
        %1185 = vmatprep.subr.bf16.mxu0 0
        %1186 = vmatpush1.bf16.msra.mxu0 0
        %1187 = vmatprep.subr.bf16.mxu0 0
        %1188 = vmatpush1.bf16.msra.mxu0 0
        %1189 = vmatprep.mubr.bf16.mxu0 0
        %1190 = vmatmul.mubr.bf16.gmra.mrb[0].mxu0 %v1130
        %v1191 = vpop.f32.mrb[0].mxu0
        %v1192 = vadd.f32 0.0, %v1191
        %v1193 = vpop.f32.mrb[0].mxu0
        %v1194 = vpop.f32.mrb[0].mxu0
        %v1195 = vadd.f32 0.0, %v1194
        %v1196 = vpop.f32.mrb[0].mxu0
        %1197 = vmatprep.mubr.bf16.mxu0 0
        %1198 = vmatmul.mubr.bf16.gmra.mrb[0].mxu0 %v1133
        %v1199 = vpop.f32.mrb[0].mxu0
        %v1200 = vadd.f32 0.0, %v1199
        %v1201 = vpop.f32.mrb[0].mxu0
        %v1202 = vpop.f32.mrb[0].mxu0
        %v1203 = vadd.f32 0.0, %v1202
        %v1204 = vpop.f32.mrb[0].mxu0
        %1205 = vmatprep.mubr.bf16.mxu0 0
        %1206 = vmatmul.mubr.bf16.gmra.mrb[0].mxu0 %v1136
        %v1207 = vpop.f32.mrb[0].mxu0
        %v1208 = vadd.f32 0.0, %v1207
        %v1209 = vpop.f32.mrb[0].mxu0
        %v1210 = vpop.f32.mrb[0].mxu0
        %v1211 = vadd.f32 0.0, %v1210
        %v1212 = vpop.f32.mrb[0].mxu0
        %1213 = vmatprep.mubr.bf16.mxu0 0
        %1214 = vmatmul.mubr.bf16.gmra.mrb[0].mxu0 %v1139
        %v1215 = vpop.f32.mrb[0].mxu0
        %v1216 = vadd.f32 0.0, %v1215
        %v1217 = vpop.f32.mrb[0].mxu0
        %v1218 = vpop.f32.mrb[0].mxu0
        %v1219 = vadd.f32 0.0, %v1218
        %v1220 = vpop.f32.mrb[0].mxu0
        %1221 = vmatprep.mubr.bf16.mxu0 0
        %1222 = vmatmul.mubr.bf16.gmra.mrb[0].mxu0 %v1142
        %v1223 = vpop.f32.mrb[0].mxu0
        %v1224 = vadd.f32 0.0, %v1223
        %v1225 = vpop.f32.mrb[0].mxu0
        %v1226 = vpop.f32.mrb[0].mxu0
        %v1227 = vadd.f32 0.0, %v1226
        %v1228 = vpop.f32.mrb[0].mxu0
        %1229 = vmatprep.mubr.bf16.mxu0 0
        %1230 = vmatmul.mubr.bf16.gmra.mrb[0].mxu0 %v1145
        %v1231 = vpop.f32.mrb[0].mxu0
        %v1232 = vadd.f32 0.0, %v1231
        %v1233 = vpop.f32.mrb[0].mxu0
        %v1234 = vpop.f32.mrb[0].mxu0
        %v1235 = vadd.f32 0.0, %v1234
        %v1236 = vpop.f32.mrb[0].mxu0
        %1237 = vmatprep.mubr.bf16.mxu0 0
        %1238 = vmatmul.mubr.bf16.gmra.mrb[0].mxu0 %v1148
        %v1239 = vpop.f32.mrb[0].mxu0
        %v1240 = vadd.f32 0.0, %v1239
        %v1241 = vpop.f32.mrb[0].mxu0
        %v1242 = vpop.f32.mrb[0].mxu0
        %v1243 = vadd.f32 0.0, %v1242
        %v1244 = vpop.f32.mrb[0].mxu0
        %1245 = vmatprep.mubr.bf16.mxu0 0
        %1246 = vmatmul.mubr.bf16.gmra.mrb[0].mxu0 %v1151
        %v1247 = vpop.f32.mrb[0].mxu0
        %v1248 = vadd.f32 0.0, %v1247
        %v1249 = vpop.f32.mrb[0].mxu0
        %v1250 = vpop.f32.mrb[0].mxu0
        %v1251 = vadd.f32 0.0, %v1250
        %v1252 = vpop.f32.mrb[0].mxu0
        %1253 = vdwg.mxu0
        %v1254 = vld [vmem:[%s2] sm:$0x1]
        %v1256 = vlaneseq
        %v1257 = vshrl.u32 %v1256, 7
        %v1258 = vsub.s32 0, %v1257
        %v1259 = vrot.slane %v1254, %v1258
        %v1261 = vmul.f32 %v1192, %v1259
        %v1262 = vmul.f32 %v1195, %v1259
        %v1263 = vmul.f32 %v1200, %v1259
        %v1264 = vmul.f32 %v1203, %v1259
        %v1265 = vmul.f32 %v1208, %v1259
        %v1266 = vmul.f32 %v1211, %v1259
        %v1267 = vmul.f32 %v1216, %v1259
        %v1268 = vmul.f32 %v1219, %v1259
        %v1269 = vmul.f32 %v1224, %v1259
        %v1270 = vmul.f32 %v1227, %v1259
        %v1271 = vmul.f32 %v1232, %v1259
        %v1272 = vmul.f32 %v1235, %v1259
        %v1273 = vmul.f32 %v1240, %v1259
        %v1274 = vmul.f32 %v1243, %v1259
        %v1275 = vmul.f32 %v1248, %v1259
        %v1276 = vmul.f32 %v1251, %v1259
        %v1277 = vld [vmem:[%s3] sm:$0x1]
        %v1279 = vlaneseq
        %v1280 = vshrl.u32 %v1279, 7
        %v1281 = vsub.s32 0, %v1280
        %v1282 = vrot.slane %v1277, %v1281
        %v1284 = vadd.f32 %v1261, %v1282
        %v1285 = vadd.f32 %v1262, %v1282
        %v1286 = vadd.f32 %v1263, %v1282
        %v1287 = vadd.f32 %v1264, %v1282
        %v1288 = vadd.f32 %v1265, %v1282
        %v1289 = vadd.f32 %v1266, %v1282
        %v1290 = vadd.f32 %v1267, %v1282
        %v1291 = vadd.f32 %v1268, %v1282
        %v1292 = vadd.f32 %v1269, %v1282
        %v1293 = vadd.f32 %v1270, %v1282
        %v1294 = vadd.f32 %v1271, %v1282
        %v1295 = vadd.f32 %v1272, %v1282
        %v1296 = vadd.f32 %v1273, %v1282
        %v1297 = vadd.f32 %v1274, %v1282
        %v1298 = vadd.f32 %v1275, %v1282
        %v1299 = vadd.f32 %v1276, %v1282
        %vm1300 = vcmp.ge.f32.partialorder %v1284, 0.0
        %vm1301 = vcmp.ge.f32.partialorder %v1285, 0.0
        %vm1302 = vcmp.ge.f32.partialorder %v1286, 0.0
        %vm1303 = vcmp.ge.f32.partialorder %v1287, 0.0
        %vm1304 = vcmp.ge.f32.partialorder %v1288, 0.0
        %vm1305 = vcmp.ge.f32.partialorder %v1289, 0.0
        %vm1306 = vcmp.ge.f32.partialorder %v1290, 0.0
        %vm1307 = vcmp.ge.f32.partialorder %v1291, 0.0
        %vm1308 = vcmp.ge.f32.partialorder %v1292, 0.0
        %vm1309 = vcmp.ge.f32.partialorder %v1293, 0.0
        %vm1310 = vcmp.ge.f32.partialorder %v1294, 0.0
        %vm1311 = vcmp.ge.f32.partialorder %v1295, 0.0
        %vm1312 = vcmp.ge.f32.partialorder %v1296, 0.0
        %vm1313 = vcmp.ge.f32.partialorder %v1297, 0.0
        %vm1314 = vcmp.ge.f32.partialorder %v1298, 0.0
        %vm1315 = vcmp.ge.f32.partialorder %v1299, 0.0
        %v1316 = vmul.f32 %v1284, 0.1
        %v1317 = vmul.f32 %v1285, 0.1
        %v1318 = vmul.f32 %v1286, 0.1
        %v1319 = vmul.f32 %v1287, 0.1
        %v1320 = vmul.f32 %v1288, 0.1
        %v1321 = vmul.f32 %v1289, 0.1
        %v1322 = vmul.f32 %v1290, 0.1
        %v1323 = vmul.f32 %v1291, 0.1
        %v1324 = vmul.f32 %v1292, 0.1
        %v1325 = vmul.f32 %v1293, 0.1
        %v1326 = vmul.f32 %v1294, 0.1
        %v1327 = vmul.f32 %v1295, 0.1
        %v1328 = vmul.f32 %v1296, 0.1
        %v1329 = vmul.f32 %v1297, 0.1
        %v1330 = vmul.f32 %v1298, 0.1
        %v1331 = vmul.f32 %v1299, 0.1
        %v1332 = vsel %vm1300, %v1284, %v1316
        %v1333 = vsel %vm1301, %v1285, %v1317
        %v1334 = vsel %vm1302, %v1286, %v1318
        %v1335 = vsel %vm1303, %v1287, %v1319
        %v1336 = vsel %vm1304, %v1288, %v1320
        %v1337 = vsel %vm1305, %v1289, %v1321
        %v1338 = vsel %vm1306, %v1290, %v1322
        %v1339 = vsel %vm1307, %v1291, %v1323
        %v1340 = vsel %vm1308, %v1292, %v1324
        %v1341 = vsel %vm1309, %v1293, %v1325
        %v1342 = vsel %vm1310, %v1294, %v1326
        %v1343 = vsel %vm1311, %v1295, %v1327
        %v1344 = vsel %vm1312, %v1296, %v1328
        %v1345 = vsel %vm1313, %v1297, %v1329
        %v1346 = vsel %vm1314, %v1298, %v1330
        %v1347 = vsel %vm1315, %v1299, %v1331
        %v1348 = vpack.c.bf16 %v1333, %v1332
        %v1349 = vpack.c.bf16 %v1335, %v1334
        %v1350 = vpack.c.bf16 %v1337, %v1336
        %v1351 = vpack.c.bf16 %v1339, %v1338
        %v1352 = vpack.c.bf16 %v1341, %v1340
        %v1353 = vpack.c.bf16 %v1343, %v1342
        %v1354 = vpack.c.bf16 %v1345, %v1344
        %v1355 = vpack.c.bf16 %v1347, %v1346
        %v1356 = vld [vmem:[%s4] sm:$0xf]
        %v1357 = vld [vmem:[%s5] sm:$0x1]
        %v1359 = vlaneseq
        %v1360 = vshrl.u32 %v1359, 7
        %v1361 = vsub.s32 0, %v1360
        %v1362 = vrot.slane %v1357, %v1361
        %vm1364 = vcmask 64512
        %v1366 = vsel %vm1364, %v1348, 0
        %v1369 = vsel %vm1364, %v1349, 0
        %v1372 = vsel %vm1364, %v1350, 0
        %v1375 = vsel %vm1364, %v1351, 0
        %v1378 = vsel %vm1364, %v1352, 0
        %v1381 = vsel %vm1364, %v1353, 0
        %v1384 = vsel %vm1364, %v1354, 0
        %v1387 = vsel %vm1364, %v1355, 0
        %vm1389 = vcmask 1043456
        %v1391 = vsel %vm1389, %v1356, 0
        %1393 = vmatprep.subr.bf16.mxu0 0
        %1394 = vmatpush1.bf16.msra.mxu0 %v1391
        %1395 = vmatprep.subr.bf16.mxu0 0
        %1396 = vmatpush1.bf16.msra.mxu0 0
        %1397 = vmatprep.subr.bf16.mxu0 0
        %1398 = vmatpush1.bf16.msra.mxu0 0
        %1399 = vmatprep.subr.bf16.mxu0 0
        %1400 = vmatpush1.bf16.msra.mxu0 0
        %1401 = vmatprep.subr.bf16.mxu0 0
        %1402 = vmatpush1.bf16.msra.mxu0 0
        %1403 = vmatprep.subr.bf16.mxu0 0
        %1404 = vmatpush1.bf16.msra.mxu0 0
        %1405 = vmatprep.subr.bf16.mxu0 0
        %1406 = vmatpush1.bf16.msra.mxu0 0
        %1407 = vmatprep.subr.bf16.mxu0 0
        %1408 = vmatpush1.bf16.msra.mxu0 0
        %1409 = vmatprep.subr.bf16.mxu0 0
        %1410 = vmatpush1.bf16.msra.mxu0 0
        %1411 = vmatprep.subr.bf16.mxu0 0
        %1412 = vmatpush1.bf16.msra.mxu0 0
        %1413 = vmatprep.subr.bf16.mxu0 0
        %1414 = vmatpush1.bf16.msra.mxu0 0
        %1415 = vmatprep.subr.bf16.mxu0 0
        %1416 = vmatpush1.bf16.msra.mxu0 0
        %1417 = vmatprep.subr.bf16.mxu0 0
        %1418 = vmatpush1.bf16.msra.mxu0 0
        %1419 = vmatprep.subr.bf16.mxu0 0
        %1420 = vmatpush1.bf16.msra.mxu0 0
        %1421 = vmatprep.subr.bf16.mxu0 0
        %1422 = vmatpush1.bf16.msra.mxu0 0
        %1423 = vmatprep.subr.bf16.mxu0 0
        %1424 = vmatpush1.bf16.msra.mxu0 0
        %1425 = vmatprep.mubr.bf16.mxu0 0
        %1426 = vmatmul.mubr.bf16.gmra.mrb[0].mxu0 %v1366
        %v1427 = vpop.f32.mrb[0].mxu0
        %v1428 = vadd.f32 %v1362, %v1427
        %v1429 = vpop.f32.mrb[0].mxu0
        %v1430 = vpop.f32.mrb[0].mxu0
        %v1431 = vadd.f32 %v1362, %v1430
        %v1432 = vpop.f32.mrb[0].mxu0
        %1433 = vmatprep.mubr.bf16.mxu0 0
        %1434 = vmatmul.mubr.bf16.gmra.mrb[0].mxu0 %v1369
        %v1435 = vpop.f32.mrb[0].mxu0
        %v1436 = vadd.f32 %v1362, %v1435
        %v1437 = vpop.f32.mrb[0].mxu0
        %v1438 = vpop.f32.mrb[0].mxu0
        %v1439 = vadd.f32 %v1362, %v1438
        %v1440 = vpop.f32.mrb[0].mxu0
        %1441 = vmatprep.mubr.bf16.mxu0 0
        %1442 = vmatmul.mubr.bf16.gmra.mrb[0].mxu0 %v1372
        %v1443 = vpop.f32.mrb[0].mxu0
        %v1444 = vadd.f32 %v1362, %v1443
        %v1445 = vpop.f32.mrb[0].mxu0
        %v1446 = vpop.f32.mrb[0].mxu0
        %v1447 = vadd.f32 %v1362, %v1446
        %v1448 = vpop.f32.mrb[0].mxu0
        %1449 = vmatprep.mubr.bf16.mxu0 0
        %1450 = vmatmul.mubr.bf16.gmra.mrb[0].mxu0 %v1375
        %v1451 = vpop.f32.mrb[0].mxu0
        %v1452 = vadd.f32 %v1362, %v1451
        %v1453 = vpop.f32.mrb[0].mxu0
        %v1454 = vpop.f32.mrb[0].mxu0
        %v1455 = vadd.f32 %v1362, %v1454
        %v1456 = vpop.f32.mrb[0].mxu0
        %1457 = vmatprep.mubr.bf16.mxu0 0
        %1458 = vmatmul.mubr.bf16.gmra.mrb[0].mxu0 %v1378
        %v1459 = vpop.f32.mrb[0].mxu0
        %v1460 = vadd.f32 %v1362, %v1459
        %v1461 = vpop.f32.mrb[0].mxu0
        %v1462 = vpop.f32.mrb[0].mxu0
        %v1463 = vadd.f32 %v1362, %v1462
        %v1464 = vpop.f32.mrb[0].mxu0
        %1465 = vmatprep.mubr.bf16.mxu0 0
        %1466 = vmatmul.mubr.bf16.gmra.mrb[0].mxu0 %v1381
        %v1467 = vpop.f32.mrb[0].mxu0
        %v1468 = vadd.f32 %v1362, %v1467
        %v1469 = vpop.f32.mrb[0].mxu0
        %v1470 = vpop.f32.mrb[0].mxu0
        %v1471 = vadd.f32 %v1362, %v1470
        %v1472 = vpop.f32.mrb[0].mxu0
        %1473 = vmatprep.mubr.bf16.mxu0 0
        %1474 = vmatmul.mubr.bf16.gmra.mrb[0].mxu0 %v1384
        %v1475 = vpop.f32.mrb[0].mxu0
        %v1476 = vadd.f32 %v1362, %v1475
        %v1477 = vpop.f32.mrb[0].mxu0
        %v1478 = vpop.f32.mrb[0].mxu0
        %v1479 = vadd.f32 %v1362, %v1478
        %v1480 = vpop.f32.mrb[0].mxu0
        %1481 = vmatprep.mubr.bf16.mxu0 0
        %1482 = vmatmul.mubr.bf16.gmra.mrb[0].mxu0 %v1387
        %v1483 = vpop.f32.mrb[0].mxu0
        %v1484 = vadd.f32 %v1362, %v1483
        %v1485 = vpop.f32.mrb[0].mxu0
        %v1486 = vpop.f32.mrb[0].mxu0
        %v1487 = vadd.f32 %v1362, %v1486
        %v1488 = vpop.f32.mrb[0].mxu0
        %1489 = vdwg.mxu0
        %1490 = vst [vmem:[%s258] sm:$0xff] %v1428
        %1491 = vst [vmem:[%s258 + $0x8] sm:$0xff] %v1431
        %1492 = vst [vmem:[%s258 + $0x10] sm:$0xff] %v1436
        %1493 = vst [vmem:[%s258 + $0x18] sm:$0xff] %v1439
        %1494 = vst [vmem:[%s258 + $0x20] sm:$0xff] %v1444
        %1495 = vst [vmem:[%s258 + $0x28] sm:$0xff] %v1447
        %1496 = vst [vmem:[%s258 + $0x30] sm:$0xff] %v1452
        %1497 = vst [vmem:[%s258 + $0x38] sm:$0xff] %v1455
        %1498 = vst [vmem:[%s258 + $0x40] sm:$0xff] %v1460
        %1499 = vst [vmem:[%s258 + $0x48] sm:$0xff] %v1463
        %1500 = vst [vmem:[%s258 + $0x50] sm:$0xff] %v1468
        %1501 = vst [vmem:[%s258 + $0x58] sm:$0xff] %v1471
        %1502 = vst [vmem:[%s258 + $0x60] sm:$0xff] %v1476
        %1503 = vst [vmem:[%s258 + $0x68] sm:$0xff] %v1479
        %1504 = vst [vmem:[%s258 + $0x70] sm:$0xff] %v1484
        %1505 = vst [vmem:[%s258 + $0x78] sm:$0xff] %v1487
        %s1506 = sand.u32 %s173, 1
        %s1507 = scalar_lea.sflag [#allocation4], %s1506
        %s1508 = sand.u32 %s173, 1
        %s1509 = smul.addr %s1508, 128
        %s1510 = scalar_lea.vmem [#allocation3], %s1509
        // Predicated region
        $region45: #{tpu_custom_call.1} parent=43 // pred_check
          %p1511 = pneg %p183
        $region46: #{tpu_custom_call.1} parent=43 // pred_check_branch
          %1513 = sbr.rel (%p1511) target = $region48
        $region47: #{tpu_custom_call.1} parent=43 // pred_region
          %s1514 = smul.u32 8, %s25
          %s1516 = ssub.s32 2048, 2048
          %1517 = vsyncadd %s1507, %s1516
          %s1518 = smul.addr %s1514, 2
          %s1519 = smul.addr %s24, 32
          %s1520 = sadd.s32 %s1518, %s1519
          %s1521 = smul.addr %s1520, 128
          %s1522 = scalar_lea.hbm %s6, %s1521
          %s1523 = sshll.u32 %s1510, 4
          %s1524 = int_to_ptr.vmem [resolvable:$true] %s1523
          %1529 = dma.vmem_to_hbm [thread:$0]  %s1524, 2048, %s1522, %s1507, 128, 128, 8
        $region48: #{tpu_custom_call.1} parent=43 // pred_fallthru
          _
      $region44: #{tpu_custom_call.1} parent=5 // pred_fallthru
        _
      %p1530 = scmp.le.s32.totalorder 2, %s15
      // Predicated region
      $region49: #{tpu_custom_call.1} parent=5 // pred_check
        %p1531 = pneg %p1530
      $region50: #{tpu_custom_call.1} parent=5 // pred_check_branch
        %1533 = sbr.rel (%p1531) target = $region52
      $region51: #{tpu_custom_call.1} parent=5 // pred_region
        %s1534 = ssub.s32 %s15, 2
        // Predicated region
        $region53: #{tpu_custom_call.1} parent=51 // pred_check
          %p1535 = pneg %p189
        $region54: #{tpu_custom_call.1} parent=51 // pred_check_branch
          %1537 = sbr.rel (%p1535) target = $region56
        $region55: #{tpu_custom_call.1} parent=51 // pred_region
          %s1538 = sand.u32 %s174, 1
          %s1539 = scalar_lea.sflag [#allocation4], %s1538
          %s1540 = sand.u32 %s174, 1
          %s1541 = smul.addr %s1540, 128
          %s1542 = scalar_lea.vmem [#allocation3], %s1541
          %1543 = dma.done %s1539, 2048
        $region56: #{tpu_custom_call.1} parent=51 // pred_fallthru
          _
      $region52: #{tpu_custom_call.1} parent=5 // pred_fallthru
        _
    $region6: #{tpu_custom_call.1} parent=1 // loop_footer
      %s19 = sadd.s32 1, %s15
    $region7: #{tpu_custom_call.1} parent=1 // loop_footer_branch
      %14 = sbr.rel target = $region3
    $region8: #{tpu_custom_call.1} parent=1 // loop_exit
      _
    %1544 = vsyncpa [#allocation4], 1
    %s1545 = scalar_lea.sflag [#allocation4], 1
    %1546 = vsyncpa %s1545, 1

</llo_original>
